<compile_context>
chip_gen: v7x
topology: tpu7x:2x2x1
jax: 0.10.0
libtpu: 0.0.40
codegen_flags: <defaults>
</compile_context>

<pallas_src>
import functools

import numpy as np

import jax
import jax.numpy as jnp
from jax.experimental import pallas as pl
from jax.experimental.pallas import tpu as pltpu


GEM_P = 3.0
GEM_EPS = 1e-6
L2_EPS = 1e-12
_LANE = 128


def _pow_p(x, p):
    """x ** p as an explicit multiply chain for small integer p (keeps the
    big feature blocks off the single EUP slot)."""
    if float(p).is_integer() and 1 <= p <= 8:
        out = x
        for _ in range(int(p) - 1):
            out = out * x
        return out
    return x ** p


def _fused_kernel(x_ref, wc_ref, bc_ref, oh_ref, oht_ref, wp_ref, bp_ref,
                  corr_ref, out_ref, acc_ref, *, p, inv_s, cube_dtype):
    """Fused conv + GeM + per-teacher L2 norm + stacked PCA for ALL teachers.

    x_ref   : (BB, 3, St)        one batch block, one spatial tile (lanes = S)
    wc_ref  : (Cf_total, 3)      concatenated 1x1-conv weights (BGR folded)
    bc_ref  : (Cf_total, 1)      concatenated conv biases (f32)
    oh_ref  : (Cf_total, T)      one-hot teacher membership
    oht_ref : (T, Cf_total)      its transpose (precomputed host-side)
    wp_ref  : (Cf_total, T*D)    block-diagonal stacked PCA weights
    bp_ref  : (1, T*D)           concatenated PCA biases
    corr_ref: (1, Cf_total)      exact GeM correction for zero-padded positions
    out_ref : (BB, T*D)
    acc_ref : (BB, Cf_total, 128) f32 lane-partial GeM accumulator (scratch)
    """
    s = pl.program_id(1)

    @pl.when(s == 0)
    def _():
        acc_ref[...] = jnp.zeros_like(acc_ref)

    x = x_ref[...]                                   # (BB, 3, St)
    w = wc_ref[...]                                  # (Cf, 3), same dtype as x
    bb, _, st = x.shape
    cf = w.shape[0]

    # 1x1 conv on the MXU: batched (Cf,3) x (3,St) contraction, f32 accumulate.
    wb = jnp.broadcast_to(w[None], (bb, cf, w.shape[1]))
    feat = jax.lax.dot_general(
        wb, x, (((2,), (1,)), ((0,), (0,))),
        preferred_element_type=jnp.float32)          # (BB, Cf, St) f32
    bias = bc_ref[...][None]                         # (1, Cf, 1)

    # GeM partial sums with a lane-partial accumulator: bias + ReLU/eps clamp +
    # cube per 128-lane chunk (pure VPU); no per-tile cross-lane reduce.
    partial = None
    for i in range(st // _LANE):
        c = feat[:, :, i * _LANE:(i + 1) * _LANE]
        c = jnp.maximum(c + bias, GEM_EPS)           # ReLU fused into eps clamp
        if cube_dtype != jnp.float32:                # optional bf16 VPU packing
            c = c.astype(cube_dtype)
        cp = _pow_p(c, p).astype(jnp.float32)
        partial = cp if partial is None else partial + cp
    acc_ref[...] += partial                          # (BB, Cf, 128)

    @pl.when(s == pl.num_programs(1) - 1)
    def _():
        # single cross-lane (XLU) reduce per batch block; subtract the exact
        # contribution of zero-padded spatial positions.
        ssum = jnp.sum(acc_ref[...], axis=-1) - corr_ref[...]       # (BB, Cf)
        mean_p = jnp.maximum(ssum * inv_s, GEM_EPS ** p)
        pooled = mean_p ** (1.0 / p)                                # (BB, Cf)
        sq = pooled * pooled
        # per-teacher sum of squares via two tiny one-hot matmuls (O(Cf*T))
        ssq_t = jnp.dot(sq, oh_ref[...],
                        preferred_element_type=jnp.float32)         # (BB, T)
        ssq = jnp.dot(ssq_t, oht_ref[...],
                      preferred_element_type=jnp.float32)           # (BB, Cf)
        # torch F.normalize: x / max(||x||, eps) == x * rsqrt(max(ssq, eps^2))
        normed = pooled * jax.lax.rsqrt(jnp.maximum(ssq, L2_EPS * L2_EPS))
        # block-diagonal PCA projection for all teachers at once (MXU)
        out_ref[...] = (jnp.dot(normed, wp_ref[...],
                                preferred_element_type=jnp.float32)
                        + bp_ref[...]).astype(out_ref.dtype)


def _vmem_bytes(bb, cf, s_tile, t, d, x_itemsize):
    """Rough live-VMEM estimate for one grid step (used to budget the tile)."""
    x_blk = 2 * bb * 3 * s_tile * x_itemsize          # double-buffered input
    feat = bb * cf * s_tile * 4                       # MXU conv output (f32)
    chunk = 2 * bb * cf * _LANE * 4                   # cube chunk + running partial
    consts = (cf * 3 * x_itemsize + cf * 4 + cf * t * 4 + t * cf * 4
              + cf * t * d * 4 + t * d * 4 + cf * 4)  # single-buffered constants
    acc = bb * cf * _LANE * 4                         # GeM scratch accumulator
    out = 2 * bb * t * d * 4                          # double-buffered output
    return x_blk + feat + chunk + consts + acc + out


def multi_teacher_forward(x_nchw, teachers, params, *, p=GEM_P, batch_block=8,
                          s_tile_cap=1024, vmem_budget_bytes=40 << 20,
                          compute_dtype=None):
    """Full MultiTeacher forward.

    x_nchw       : (B, 3, H, W)  PyTorch layout (kept planar; only reshaped)
    compute_dtype: None keeps f32 everywhere (module semantics); jnp.bfloat16
                   enables the bf16 DMA / MXU / cube fast path (v6e/v7x).
    returns      : list of (B, embed_dim) arrays, one per teacher.
    """
    B, C, H, W = x_nchw.shape
    assert C == 3, "MultiTeacher expects RGB input"
    S = H * W
    x_bcs = x_nchw.reshape(B, C, S)          # pure reshape; no transpose pass
    if compute_dtype is not None:
        x_bcs = x_bcs.astype(compute_dtype)
    x_dtype = x_bcs.dtype

    # ---- fold BGR flip into weights & concatenate teachers (host-side glue) --
    cfs, w_conv_t, b_conv_c, w_pcas, b_pcas = [], [], [], [], []
    for teacher, prm in zip(teachers, params):
        w = prm['w_conv']                                    # (3, Cf)
        if teacher.endswith('delg') or teacher.endswith('dolg'):
            w = w[::-1, :]        # conv(x[:, ::-1], W) == conv(x, W[::-1]) exactly
        cfs.append(w.shape[1])
        w_conv_t.append(w.T)                                 # (Cf, 3)
        b_conv_c.append(prm['b_conv'].reshape(-1, 1))        # (Cf, 1)
        w_pcas.append(prm['w_pca'])                          # (Cf, D)
        b_pcas.append(prm['b_pca'])                          # (1, D)

    T = len(teachers)
    D = w_pcas[0].shape[1]
    assert all(wp.shape[1] == D for wp in w_pcas)
    Cf_total = sum(cfs)

    w_conv_all = jnp.concatenate(w_conv_t, axis=0).astype(x_dtype)      # (Cf, 3)
    b_conv_all = jnp.concatenate(b_conv_c, axis=0).astype(jnp.float32)  # (Cf, 1)
    b_pca_all = jnp.concatenate(b_pcas, axis=1).astype(jnp.float32)     # (1, T*D)

    # block-diagonal stacked PCA weights (Cf_total, T*D)
    w_pca_blk = jnp.zeros((Cf_total, T * D), jnp.float32)
    off = 0
    for t, (wp, cf) in enumerate(zip(w_pcas, cfs)):
        w_pca_blk = w_pca_blk.at[off:off + cf, t * D:(t + 1) * D].set(wp)
        off += cf

    # O(Cf*T) one-hot membership matrices (replaces the Cf^2 segment matrix)
    seg_ids = np.concatenate([np.full(cf, t, np.int32)
                              for t, cf in enumerate(cfs)])
    onehot_np = (seg_ids[:, None] == np.arange(T)[None, :]).astype(np.float32)
    onehot = jnp.asarray(onehot_np)                           # (Cf_total, T)
    onehot_t = jnp.asarray(np.ascontiguousarray(onehot_np.T)) # (T, Cf_total)

    # ---- batch block: pad batch; keep >= 2 "parallel" steps for v7x megacore -
    BB = max(1, min(batch_block, B))
    while BB > 1 and -(-B // BB) < 2:
        BB //= 2
    Bp = ((B + BB - 1) // BB) * BB
    if Bp != B:
        x_bcs = jnp.pad(x_bcs, ((0, Bp - B), (0, 0), (0, 0)))
    nB = Bp // BB

    # ---- pad S to a multiple of 128 (zeros) + exact GeM correction ----------
    Sp = ((S + _LANE - 1) // _LANE) * _LANE
    n_pad = Sp - S
    if n_pad:
        x_bcs = jnp.pad(x_bcs, ((0, 0), (0, 0), (0, n_pad)))
    # padded positions see x == 0 exactly -> feat = max(bias, eps); subtract
    # their exact n_pad * max(bias, eps)^p contribution in the epilogue.
    if n_pad:
        m = jnp.maximum(b_conv_all.reshape(1, -1), GEM_EPS)
        gem_corr = float(n_pad) * _pow_p(m, p)
    else:
        gem_corr = jnp.zeros((1, Cf_total), jnp.float32)

    # ---- spatial tile from an explicit VMEM budget (v7x-safe), capped -------
    x_itemsize = jnp.dtype(x_dtype).itemsize
    s_tile = _LANE
    for cand in range(_LANE, min(Sp, s_tile_cap) + 1, _LANE):
        if Sp % cand == 0 and _vmem_bytes(BB, Cf_total, cand, T, D,
                                          x_itemsize) <= vmem_budget_bytes:
            s_tile = cand
    est = _vmem_bytes(BB, Cf_total, s_tile, T, D, x_itemsize)
    vmem_limit = int(min(64 << 20, max(32 << 20, int(est * 1.5))))

    grid = (nB, Sp // s_tile)
    cube_dtype = (jnp.dtype(compute_dtype) if compute_dtype is not None
                  else jnp.dtype(jnp.float32))
    kernel = functools.partial(_fused_kernel, p=p, inv_s=1.0 / S,
                               cube_dtype=cube_dtype)

    const = pl.Buffered(1)   # constant operands: single-buffer (halve footprint)

    out = pl.pallas_call(
        kernel,
        out_shape=jax.ShapeDtypeStruct((nB, BB, T * D), jnp.float32),
        grid_spec=pltpu.PrefetchScalarGridSpec(
            num_scalar_prefetch=0,
            grid=grid,
            in_specs=[
                pl.BlockSpec((BB, 3, s_tile), lambda bi, si: (bi, 0, si)),
                pl.BlockSpec((Cf_total, 3), lambda bi, si: (0, 0),
                             pipeline_mode=const),
                pl.BlockSpec((Cf_total, 1), lambda bi, si: (0, 0),
                             pipeline_mode=const),
                pl.BlockSpec((Cf_total, T), lambda bi, si: (0, 0),
                             pipeline_mode=const),
                pl.BlockSpec((T, Cf_total), lambda bi, si: (0, 0),
                             pipeline_mode=const),
                pl.BlockSpec((Cf_total, T * D), lambda bi, si: (0, 0),
                             pipeline_mode=const),
                pl.BlockSpec((1, T * D), lambda bi, si: (0, 0),
                             pipeline_mode=const),
                pl.BlockSpec((1, Cf_total), lambda bi, si: (0, 0),
                             pipeline_mode=const),
            ],
            out_specs=pl.BlockSpec((None, BB, T * D), lambda bi, si: (bi, 0, 0)),
            scratch_shapes=[pltpu.VMEM((BB, Cf_total, _LANE), jnp.float32)],
        ),
        compiler_params=pltpu.CompilerParams(
            dimension_semantics=("parallel", "arbitrary"),
            vmem_limit_bytes=vmem_limit),
    )(x_bcs, w_conv_all, b_conv_all, onehot, onehot_t,
      w_pca_blk, b_pca_all, gem_corr)

    out = out.reshape(Bp, T * D)[:B]
    return [out[:, t * D:(t + 1) * D] for t in range(T)]


def _reference_forward(x_nchw, teachers, params, *, p=GEM_P):
    """Pure-JAX reference (matches the PyTorch module with synthetic encoders)."""
    B, C, H, W = x_nchw.shape
    x_bsc = jnp.transpose(x_nchw, (0, 2, 3, 1)).reshape(B, H * W, C)
    hp = jax.lax.Precision.HIGHEST
    outs = []
    for teacher, prm in zip(teachers, params):
        xin = x_bsc[..., ::-1] if (teacher.endswith('delg')
                                   or teacher.endswith('dolg')) else x_bsc
        feat = jnp.maximum(jnp.einsum('bsc,cf->bsf', xin, prm['w_conv'],
                                      precision=hp) + prm['b_conv'], 0.0)
        feat = jnp.maximum(feat, GEM_EPS)
        pooled = jnp.mean(feat ** p, axis=1) ** (1.0 / p)
        norm = jnp.sqrt(jnp.sum(pooled * pooled, axis=-1, keepdims=True))
        normed = pooled / jnp.maximum(norm, L2_EPS)
        outs.append(jnp.dot(normed, prm['w_pca'], precision=hp) + prm['b_pca'])
    return outs


def make_params(key, teachers, encoder_dims, embed_dim, cin=3):
    """Deterministic synthetic parameters (stand-ins for pretrained weights)."""
    params = []
    for i, (teacher, cf) in enumerate(zip(teachers, encoder_dims)):
        k = jax.random.fold_in(key, i)
        k1, k2, k3, k4 = jax.random.split(k, 4)
        params.append(dict(
            w_conv=0.2 * jax.random.normal(k1, (cin, cf), jnp.float32),
            b_conv=0.05 * jax.random.normal(k2, (1, cf), jnp.float32),
            w_pca=0.1 * jax.random.normal(k3, (cf, embed_dim), jnp.float32),
            b_pca=0.01 * jax.random.normal(k4, (1, embed_dim), jnp.float32),
        ))
    return params


if __name__ == "__main__":
    key = jax.random.PRNGKey(0)

    # Small shapes consistent with the module: RGB images, two teachers
    # (the second one triggers the BGR flip branch).
    B, C, H, W = 2, 3, 16, 16
    teachers = ("resnet_gem", "resnet_dolg")
    encoder_dims = [32, 48]     # per-teacher encoder embed_dim
    embed_dim = 32              # shared PCA output dim

    kx, kp = jax.random.split(key)
    x = jax.random.normal(kx, (B, C, H, W), jnp.float32)   # NCHW like PyTorch
    params = make_params(kp, teachers, encoder_dims, embed_dim, cin=C)

    # 1) default f32 path: must match the HIGHEST-precision reference tightly
    outs = multi_teacher_forward(x, teachers, params)
    outs = [jax.block_until_ready(o) for o in outs]
    refs = _reference_forward(x, teachers, params)
    for o, r in zip(outs, refs):
        assert o.shape == (B, embed_dim), o.shape
        assert jnp.allclose(o, r, rtol=1e-4, atol=1e-5), "mismatch vs reference"

    # 2) ragged spatial size (S = 100, not a multiple of 128): exercises the
    #    host-side zero-padding + exact GeM correction path
    x2 = jax.random.normal(jax.random.fold_in(key, 7), (B, C, 10, 10),
                           jnp.float32)
    outs2 = multi_teacher_forward(x2, teachers, params)
    outs2 = [jax.block_until_ready(o) for o in outs2]
    refs2 = _reference_forward(x2, teachers, params)
    for o, r in zip(outs2, refs2):
        assert jnp.allclose(o, r, rtol=1e-4, atol=1e-5), "ragged-S mismatch"

    # 3) bf16 fast path (v6e/v7x): bf16 image DMA + bf16 MXU conv + bf16 cube,
    #    f32 accumulation -- validated at bf16-appropriate tolerance
    outs3 = multi_teacher_forward(x, teachers, params,
                                  compute_dtype=jnp.bfloat16)
    outs3 = [jax.block_until_ready(o) for o in outs3]
    for o, r in zip(outs3, refs):
        assert jnp.allclose(o, r, rtol=5e-2, atol=5e-3), "bf16 path mismatch"

    # TODO(synk): real teacher backbones (ResNet/DELG/DOLG) are deep CNNs loaded
    # from checkpoints; they are synthesized here as a 1x1-conv + GeM encoder.
    print("KERNEL_OK")
</pallas_src>

<mosaic_0001>
module attributes {stable_mosaic.version = 11 : i64} {
  func.func @_fused_kernel(%arg0: i32, %arg1: i32, %arg2: memref<1x3x256xf32, #tpu.memory_space<vmem>>, %arg3: memref<80x3xf32, #tpu.memory_space<vmem>>, %arg4: memref<80x1xf32, #tpu.memory_space<vmem>>, %arg5: memref<80x2xf32, #tpu.memory_space<vmem>>, %arg6: memref<2x80xf32, #tpu.memory_space<vmem>>, %arg7: memref<80x64xf32, #tpu.memory_space<vmem>>, %arg8: memref<1x64xf32, #tpu.memory_space<vmem>>, %arg9: memref<1x80xf32, #tpu.memory_space<vmem>>, %arg10: memref<1x1x64xf32, #tpu.memory_space<vmem>>, %arg11: memref<1x80x128xf32, #tpu.memory_space<vmem>>) attributes {dimension_semantics = [#tpu.dimension_semantics<parallel>, #tpu.dimension_semantics<arbitrary>], iteration_bounds = array<i64: 2, 1>, scalar_prefetch = 0 : i64, scratch_operands = 1 : i64, tpu.core_type = #tpu.core_type<tc>, window_params = [{transform_indices = @transform_0, window_bounds = array<i64: 1, 3, 256>}, {pipeline_mode = #tpu.pipeline_mode<synchronous>, transform_indices = @transform_1, window_bounds = array<i64: 80, 3>}, {pipeline_mode = #tpu.pipeline_mode<synchronous>, transform_indices = @transform_2, window_bounds = array<i64: 80, 1>}, {pipeline_mode = #tpu.pipeline_mode<synchronous>, transform_indices = @transform_3, window_bounds = array<i64: 80, 2>}, {pipeline_mode = #tpu.pipeline_mode<synchronous>, transform_indices = @transform_4, window_bounds = array<i64: 2, 80>}, {pipeline_mode = #tpu.pipeline_mode<synchronous>, transform_indices = @transform_5, window_bounds = array<i64: 80, 64>}, {pipeline_mode = #tpu.pipeline_mode<synchronous>, transform_indices = @transform_6, window_bounds = array<i64: 1, 64>}, {pipeline_mode = #tpu.pipeline_mode<synchronous>, transform_indices = @transform_7, window_bounds = array<i64: 1, 80>}, {transform_indices = @transform_8, window_bounds = array<i64: 1, 1, 64>}]} {
    %c0_i32 = arith.constant 0 : i32
    %0 = arith.cmpi eq, %arg1, %c0_i32 : i32
    %1 = arith.extui %0 : i1 to i32
    %c0_i32_0 = arith.constant 0 : i32
    %2 = arith.cmpi ne, %1, %c0_i32_0 : i32
    scf.if %2 {
      %cst_17 = arith.constant 0.000000e+00 : f32
      %30 = vector.broadcast %cst_17 : f32 to vector<1x80x128xf32>
      %c0_18 = arith.constant 0 : index
      %c0_19 = arith.constant 0 : index
      %c0_20 = arith.constant 0 : index
      %31 = vector.load %arg11[%c0_18, %c0_19, %c0_20] : memref<1x80x128xf32, #tpu.memory_space<vmem>>, vector<1x80x128xf32>
      tpu.vector_store %arg11[%c0_18, %c0_19, %c0_20], %30 {strides = array<i32>} : memref<1x80x128xf32, #tpu.memory_space<vmem>>, vector<1x80x128xf32>,
    } else {
    }
    %c0 = arith.constant 0 : index
    %c0_1 = arith.constant 0 : index
    %c0_2 = arith.constant 0 : index
    %3 = vector.load %arg2[%c0, %c0_1, %c0_2] : memref<1x3x256xf32, #tpu.memory_space<vmem>>, vector<1x3x256xf32>
    %c0_3 = arith.constant 0 : index
    %c0_4 = arith.constant 0 : index
    %4 = vector.load %arg3[%c0_3, %c0_4] : memref<80x3xf32, #tpu.memory_space<vmem>>, vector<80x3xf32>
    %5 = vector.shape_cast %4 : vector<80x3xf32> to vector<1x80x3xf32>
    %cst = arith.constant dense<0.000000e+00> : vector<1x80x256xf32>
    %6 = tpu.matmul %5, %3, %cst {dimension_numbers = #tpu.dot_dimension_numbers<[2], [1], [1], [2], [0, 0, 0, 1, 1, 2], [0], [0]>} : vector<1x80x3xf32>, vector<1x3x256xf32>, vector<1x80x256xf32> -> vector<1x80x256xf32>
    %c0_5 = arith.constant 0 : index
    %c0_6 = arith.constant 0 : index
    %7 = vector.load %arg4[%c0_5, %c0_6] : memref<80x1xf32, #tpu.memory_space<vmem>>, vector<80x1xf32>
    %8 = vector.shape_cast %7 : vector<80x1xf32> to vector<1x80x1xf32>
    %9 = vector.extract_strided_slice %6 {offsets = [0, 0, 0], sizes = [1, 80, 128], strides = [1, 1, 1]} : vector<1x80x256xf32> to vector<1x80x128xf32>
    %10 = vector.broadcast %8 : vector<1x80x1xf32> to vector<1x80x128xf32>
    %11 = arith.addf %9, %10 : vector<1x80x128xf32>
    %cst_7 = arith.constant 9.99999997E-7 : f32
    %12 = vector.broadcast %cst_7 : f32 to vector<1x80x128xf32>
    %13 = arith.maximumf %11, %12 : vector<1x80x128xf32>
    %14 = arith.mulf %13, %13 : vector<1x80x128xf32>
    %15 = arith.mulf %14, %13 : vector<1x80x128xf32>
    %16 = vector.extract_strided_slice %6 {offsets = [0, 0, 128], sizes = [1, 80, 128], strides = [1, 1, 1]} : vector<1x80x256xf32> to vector<1x80x128xf32>
    %17 = vector.broadcast %8 : vector<1x80x1xf32> to vector<1x80x128xf32>
    %18 = arith.addf %16, %17 : vector<1x80x128xf32>
    %cst_8 = arith.constant 9.99999997E-7 : f32
    %19 = vector.broadcast %cst_8 : f32 to vector<1x80x128xf32>
    %20 = arith.maximumf %18, %19 : vector<1x80x128xf32>
    %21 = arith.mulf %20, %20 : vector<1x80x128xf32>
    %22 = arith.mulf %21, %20 : vector<1x80x128xf32>
    %23 = arith.addf %15, %22 : vector<1x80x128xf32>
    %c0_9 = arith.constant 0 : index
    %c0_10 = arith.constant 0 : index
    %c0_11 = arith.constant 0 : index
    %24 = vector.load %arg11[%c0_9, %c0_10, %c0_11] : memref<1x80x128xf32, #tpu.memory_space<vmem>>, vector<1x80x128xf32>
    %25 = arith.addf %24, %23 : vector<1x80x128xf32>
    %c0_12 = arith.constant 0 : index
    %c0_13 = arith.constant 0 : index
    %c0_14 = arith.constant 0 : index
    %26 = vector.load %arg11[%c0_12, %c0_13, %c0_14] : memref<1x80x128xf32, #tpu.memory_space<vmem>>, vector<1x80x128xf32>
    tpu.vector_store %arg11[%c0_12, %c0_13, %c0_14], %25 {strides = array<i32>} : memref<1x80x128xf32, #tpu.memory_space<vmem>>, vector<1x80x128xf32>,
    %c0_i32_15 = arith.constant 0 : i32
    %27 = arith.cmpi eq, %arg1, %c0_i32_15 : i32
    %28 = arith.extui %27 : i1 to i32
    %c0_i32_16 = arith.constant 0 : i32
    %29 = arith.cmpi ne, %28, %c0_i32_16 : i32
    scf.if %29 {
      %c0_17 = arith.constant 0 : index
      %c0_18 = arith.constant 0 : index
      %c0_19 = arith.constant 0 : index
      %30 = vector.load %arg11[%c0_17, %c0_18, %c0_19] : memref<1x80x128xf32, #tpu.memory_space<vmem>>, vector<1x80x128xf32>
      %cst_20 = arith.constant dense<0.000000e+00> : vector<1x80xf32>
      %31 = vector.multi_reduction <add>, %30, %cst_20 [2] : vector<1x80x128xf32> to vector<1x80xf32>
      %c0_21 = arith.constant 0 : index
      %c0_22 = arith.constant 0 : index
      %32 = vector.load %arg9[%c0_21, %c0_22] : memref<1x80xf32, #tpu.memory_space<vmem>>, vector<1x80xf32>
      %33 = arith.subf %31, %32 : vector<1x80xf32>
      %cst_23 = arith.constant 3.906250e-03 : f32
      %34 = vector.broadcast %cst_23 : f32 to vector<1x80xf32>
      %35 = arith.mulf %33, %34 : vector<1x80xf32>
      %cst_24 = arith.constant 1.000000e-18 : f32
      %36 = vector.broadcast %cst_24 : f32 to vector<1x80xf32>
      %37 = arith.maximumf %35, %36 : vector<1x80xf32>
      %cst_25 = arith.constant 0.333333343 : f32
      %38 = vector.broadcast %cst_25 : f32 to vector<1x80xf32>
      %39 = math.powf %37, %38 : vector<1x80xf32>
      %40 = arith.mulf %39, %39 : vector<1x80xf32>
      %c0_26 = arith.constant 0 : index
      %c0_27 = arith.constant 0 : index
      %41 = vector.load %arg5[%c0_26, %c0_27] : memref<80x2xf32, #tpu.memory_space<vmem>>, vector<80x2xf32>
      %cst_28 = arith.constant dense<0.000000e+00> : vector<1x2xf32>
      %42 = tpu.matmul %40, %41, %cst_28 {dimension_numbers = #tpu.dot_dimension_numbers<[1], [0], [0], [1], [0, 0, 1, 1], [], []>} : vector<1x80xf32>, vector<80x2xf32>, vector<1x2xf32> -> vector<1x2xf32>
      %c0_29 = arith.constant 0 : index
      %c0_30 = arith.constant 0 : index
      %43 = vector.load %arg6[%c0_29, %c0_30] : memref<2x80xf32, #tpu.memory_space<vmem>>, vector<2x80xf32>
      %cst_31 = arith.constant dense<0.000000e+00> : vector<1x80xf32>
      %44 = tpu.matmul %42, %43, %cst_31 {dimension_numbers = #tpu.dot_dimension_numbers<[1], [0], [0], [1], [0, 0, 1, 1], [], []>} : vector<1x2xf32>, vector<2x80xf32>, vector<1x80xf32> -> vector<1x80xf32>
      %cst_32 = arith.constant 1.000000e-24 : f32
      %45 = vector.broadcast %cst_32 : f32 to vector<1x80xf32>
      %46 = arith.maximumf %44, %45 : vector<1x80xf32>
      %47 = math.rsqrt %46 : vector<1x80xf32>
      %48 = arith.mulf %39, %47 : vector<1x80xf32>
      %c0_33 = arith.constant 0 : index
      %c0_34 = arith.constant 0 : index
      %49 = vector.load %arg7[%c0_33, %c0_34] : memref<80x64xf32, #tpu.memory_space<vmem>>, vector<80x64xf32>
      %cst_35 = arith.constant dense<0.000000e+00> : vector<1x64xf32>
      %50 = tpu.matmul %48, %49, %cst_35 {dimension_numbers = #tpu.dot_dimension_numbers<[1], [0], [0], [1], [0, 0, 1, 1], [], []>} : vector<1x80xf32>, vector<80x64xf32>, vector<1x64xf32> -> vector<1x64xf32>
      %c0_36 = arith.constant 0 : index
      %c0_37 = arith.constant 0 : index
      %51 = vector.load %arg8[%c0_36, %c0_37] : memref<1x64xf32, #tpu.memory_space<vmem>>, vector<1x64xf32>
      %52 = arith.addf %50, %51 : vector<1x64xf32>
      %c0_38 = arith.constant 0 : index
      %c0_39 = arith.constant 0 : index
      %c0_40 = arith.constant 0 : index
      %53 = vector.load %arg10[%c0_38, %c0_39, %c0_40] : memref<1x1x64xf32, #tpu.memory_space<vmem>>, vector<1x1x64xf32>
      %54 = vector.shape_cast %53 : vector<1x1x64xf32> to vector<1x64xf32>
      %55 = vector.shape_cast %52 : vector<1x64xf32> to vector<1x1x64xf32>
      tpu.vector_store %arg10[%c0_38, %c0_39, %c0_40], %55 {strides = array<i32>} : memref<1x1x64xf32, #tpu.memory_space<vmem>>, vector<1x1x64xf32>,
    } else {
    }
    return
  }
  func.func @transform_0(%arg0: i32, %arg1: i32) -> (i32, i32, i32) {
    %c0_i32 = arith.constant 0 : i32
    %c0_i32_0 = arith.constant 0 : i32
    return %arg0, %c0_i32, %arg1 : i32, i32, i32
  }
  func.func @transform_1(%arg0: i32, %arg1: i32) -> (i32, i32) {
    %c0_i32 = arith.constant 0 : i32
    %c0_i32_0 = arith.constant 0 : i32
    %c0_i32_1 = arith.constant 0 : i32
    return %c0_i32, %c0_i32_0 : i32, i32
  }
  func.func @transform_2(%arg0: i32, %arg1: i32) -> (i32, i32) {
    %c0_i32 = arith.constant 0 : i32
    %c0_i32_0 = arith.constant 0 : i32
    %c0_i32_1 = arith.constant 0 : i32
    return %c0_i32, %c0_i32_0 : i32, i32
  }
  func.func @transform_3(%arg0: i32, %arg1: i32) -> (i32, i32) {
    %c0_i32 = arith.constant 0 : i32
    %c0_i32_0 = arith.constant 0 : i32
    %c0_i32_1 = arith.constant 0 : i32
    return %c0_i32, %c0_i32_0 : i32, i32
  }
  func.func @transform_4(%arg0: i32, %arg1: i32) -> (i32, i32) {
    %c0_i32 = arith.constant 0 : i32
    %c0_i32_0 = arith.constant 0 : i32
    %c0_i32_1 = arith.constant 0 : i32
    return %c0_i32, %c0_i32_0 : i32, i32
  }
  func.func @transform_5(%arg0: i32, %arg1: i32) -> (i32, i32) {
    %c0_i32 = arith.constant 0 : i32
    %c0_i32_0 = arith.constant 0 : i32
    %c0_i32_1 = arith.constant 0 : i32
    return %c0_i32, %c0_i32_0 : i32, i32
  }
  func.func @transform_6(%arg0: i32, %arg1: i32) -> (i32, i32) {
    %c0_i32 = arith.constant 0 : i32
    %c0_i32_0 = arith.constant 0 : i32
    %c0_i32_1 = arith.constant 0 : i32
    return %c0_i32, %c0_i32_0 : i32, i32
  }
  func.func @transform_7(%arg0: i32, %arg1: i32) -> (i32, i32) {
    %c0_i32 = arith.constant 0 : i32
    %c0_i32_0 = arith.constant 0 : i32
    %c0_i32_1 = arith.constant 0 : i32
    return %c0_i32, %c0_i32_0 : i32, i32
  }
  func.func @transform_8(%arg0: i32, %arg1: i32) -> (i32, i32, i32) {
    %c0_i32 = arith.constant 0 : i32
    %c0_i32_0 = arith.constant 0 : i32
    %c0_i32_1 = arith.constant 0 : i32
    return %arg0, %c0_i32, %c0_i32_0 : i32, i32, i32
  }
}

</mosaic_0001>

<llo_original>
// kernel: tpu_custom_call.1
$region0: #{tpu_custom_call.1}
  #allocation0 [shape = 'u32[]', space=smem, size = 0x4, offset = 0x4, fixed_abs, tag = 'smem constant byte address 0x4 - core index']
  #allocation1 [shape = 'u32[144,128]{1,0:T(1,128)}', space=vmem, size = 0x12000, scoped, tag = 'internal scratch']
  #allocation2 [shape = 'f32[1,80,128]{2,1,0:T(8,128)}', space=vmem, size = 0xa000, scoped, tag = 'scratch operand']
  %s0 = inlined_call_operand.vmem [shape: f32[2,3,256], index: 0, kind: input, shape index: {}]
  %s1 = inlined_call_operand.vmem [shape: f32[80,3], index: 1, kind: input, shape index: {}]
  %s2 = inlined_call_operand.vmem [shape: f32[80,1], index: 2, kind: input, shape index: {}]
  %s3 = inlined_call_operand.vmem [shape: f32[80,2], index: 3, kind: input, shape index: {}]
  %s4 = inlined_call_operand.vmem [shape: f32[2,80], index: 4, kind: input, shape index: {}]
  %s5 = inlined_call_operand.vmem [shape: f32[80,64], index: 5, kind: input, shape index: {}]
  %s6 = inlined_call_operand.vmem [shape: f32[1,64], index: 6, kind: input, shape index: {}]
  %s7 = inlined_call_operand.vmem [shape: f32[1,80], index: 7, kind: input, shape index: {}]
  %s8 = inlined_call_operand.hbm [shape: f32[2,1,64], index: 8, kind: output, shape index: {}]
  %s9 = sld [smem:[#allocation0]]
  $region73: #{tpu_custom_call.1} parent=0
    _
  %s11 = ssub.s32 1, %s9
  %s12 = scalar_select 0, %s11, %s9
  $region1: #{tpu_custom_call.1} parent=0
    #allocation3 [shape = 'u8[1024]{0}', space=vmem, size = 0x400, scoped, tag = 'output window, operand 0']
    #allocation4 [shape = 's32[2]{0}', space=sflag, size = 0x8, scoped, tag = 'scoped memory for tpu_custom_call.1']
    %13 = vsyncpa [#allocation4], 0
    %s14 = scalar_lea.sflag [#allocation4], 1
    %15 = vsyncpa %s14, 0
    loop: start=0, step=1, limit=4
    $region2: #{tpu_custom_call.1} parent=1 // loop_pre_header
      _
    $region3: #{tpu_custom_call.1} parent=1 // loop_header
      %s17 = sphi 0, %s21
      %p18 = scmp.ge.s32.totalorder %s17, 4
      %s24 = sphi 0, %s36
      %s25 = sphi 0, %s32
      %s26 = sphi 0, %s24
      %s27 = sphi 0, %s25
      %s28 = sphi 0, %s26
      %s29 = sphi 0, %s27
      %s41 = sphi 0, %s43
      %s44 = sphi 0, %s41
      %s45 = sphi 0, %s44
      %s61 = sphi 0, %s45
      %s65 = sphi 0, %s65
      %s67 = sphi 0, %s65
      %s68 = sphi 0, %s67
      %s82 = sphi 0, %s68
      %s86 = sphi 0, %s86
      %s88 = sphi 0, %s86
      %s89 = sphi 0, %s88
      %s103 = sphi 0, %s89
      %s107 = sphi 0, %s107
      %s109 = sphi 0, %s107
      %s110 = sphi 0, %s109
      %s124 = sphi 0, %s110
      %s128 = sphi 0, %s128
      %s130 = sphi 0, %s128
      %s131 = sphi 0, %s130
      %s145 = sphi 0, %s131
      %s149 = sphi 0, %s149
      %s151 = sphi 0, %s149
      %s152 = sphi 0, %s151
      %s166 = sphi 0, %s152
      %s170 = sphi 0, %s170
      %s172 = sphi 0, %s170
      %s173 = sphi 0, %s172
      %s187 = sphi 0, %s173
      %s191 = sphi 0, %s191
      %s193 = sphi 0, %s191
      %s194 = sphi 0, %s193
      %s208 = sphi 0, %s194
      %s214 = sphi 0, %s216
      %s217 = sphi 0, %s214
      %s218 = sphi 0, %s217
      %s234 = sphi 0, %s218
    $region4: #{tpu_custom_call.1} parent=1 // loop_header_branch
      %20 = sbr.rel (%p18) target = $region8
    $region5: #{tpu_custom_call.1} parent=1 // loop_body
      %s22 = ssub.s32 %s17, 1
      %s23 = ssub.s32 %s17, 2
      %s30 = sadd.s32 1, %s25
      %p31 = scmp.ge.s32.totalorder %s30, 1
      %s32 = scalar_select %p31, 0, %s30
      %s33 = sadd.s32 1, %s24
      %s34 = scalar_select %p31, %s33, %s24
      %p35 = scmp.ge.s32.totalorder %s34, 2
      %s36 = scalar_select %p35, 0, %s34
      %s37 = ssub.s32 %s24, %s36
      %s38 = ssub.s32 %s25, %s32
      %s39 = sor.u32 %s37, %s38
      %p40 = scmp.eq.s32.totalorder %s39, 0
      %s42 = sadd.s32 %s41, 1
      %s43 = scalar_select %p40, %s41, %s42
      %p46 = pneg %p40
      %p47 = scmp.eq.s32.totalorder %s17, 1
      %p48 = por %p46, %p47
      %p49 = scmp.ne.s32.totalorder %s41, %s44
      %p50 = scmp.eq.s32.totalorder %s17, 0
      %p51 = por %p49, %p50
      %p52 = scmp.ne.s32.totalorder %s41, %s44
      %p53 = scmp.eq.s32.totalorder %s22, 1
      %p54 = por %p52, %p53
      %p55 = scmp.ne.s32.totalorder %s44, %s45
      %p56 = scmp.eq.s32.totalorder %s22, 0
      %p57 = por %p55, %p56
      %p58 = scmp.ne.s32.totalorder %s44, %s45
      %p59 = scmp.eq.s32.totalorder %s23, 1
      %p60 = por %p58, %p59
      %p62 = scmp.ne.s32.totalorder %s45, %s61
      %p63 = scmp.eq.s32.totalorder %s23, 0
      %p64 = por %p62, %p63
      %s66 = sadd.s32 %s65, 1
      %p69 = scmp.eq.s32.totalorder %s17, 1
      %p70 = scmp.ne.s32.totalorder %s65, %s67
      %p71 = scmp.eq.s32.totalorder %s17, 0
      %p72 = por %p70, %p71
      %p73 = scmp.ne.s32.totalorder %s65, %s67
      %p74 = scmp.eq.s32.totalorder %s22, 1
      %p75 = por %p73, %p74
      %p76 = scmp.ne.s32.totalorder %s67, %s68
      %p77 = scmp.eq.s32.totalorder %s22, 0
      %p78 = por %p76, %p77
      %p79 = scmp.ne.s32.totalorder %s67, %s68
      %p80 = scmp.eq.s32.totalorder %s23, 1
      %p81 = por %p79, %p80
      %p83 = scmp.ne.s32.totalorder %s68, %s82
      %p84 = scmp.eq.s32.totalorder %s23, 0
      %p85 = por %p83, %p84
      %s87 = sadd.s32 %s86, 1
      %p90 = scmp.eq.s32.totalorder %s17, 1
      %p91 = scmp.ne.s32.totalorder %s86, %s88
      %p92 = scmp.eq.s32.totalorder %s17, 0
      %p93 = por %p91, %p92
      %p94 = scmp.ne.s32.totalorder %s86, %s88
      %p95 = scmp.eq.s32.totalorder %s22, 1
      %p96 = por %p94, %p95
      %p97 = scmp.ne.s32.totalorder %s88, %s89
      %p98 = scmp.eq.s32.totalorder %s22, 0
      %p99 = por %p97, %p98
      %p100 = scmp.ne.s32.totalorder %s88, %s89
      %p101 = scmp.eq.s32.totalorder %s23, 1
      %p102 = por %p100, %p101
      %p104 = scmp.ne.s32.totalorder %s89, %s103
      %p105 = scmp.eq.s32.totalorder %s23, 0
      %p106 = por %p104, %p105
      %s108 = sadd.s32 %s107, 1
      %p111 = scmp.eq.s32.totalorder %s17, 1
      %p112 = scmp.ne.s32.totalorder %s107, %s109
      %p113 = scmp.eq.s32.totalorder %s17, 0
      %p114 = por %p112, %p113
      %p115 = scmp.ne.s32.totalorder %s107, %s109
      %p116 = scmp.eq.s32.totalorder %s22, 1
      %p117 = por %p115, %p116
      %p118 = scmp.ne.s32.totalorder %s109, %s110
      %p119 = scmp.eq.s32.totalorder %s22, 0
      %p120 = por %p118, %p119
      %p121 = scmp.ne.s32.totalorder %s109, %s110
      %p122 = scmp.eq.s32.totalorder %s23, 1
      %p123 = por %p121, %p122
      %p125 = scmp.ne.s32.totalorder %s110, %s124
      %p126 = scmp.eq.s32.totalorder %s23, 0
      %p127 = por %p125, %p126
      %s129 = sadd.s32 %s128, 1
      %p132 = scmp.eq.s32.totalorder %s17, 1
      %p133 = scmp.ne.s32.totalorder %s128, %s130
      %p134 = scmp.eq.s32.totalorder %s17, 0
      %p135 = por %p133, %p134
      %p136 = scmp.ne.s32.totalorder %s128, %s130
      %p137 = scmp.eq.s32.totalorder %s22, 1
      %p138 = por %p136, %p137
      %p139 = scmp.ne.s32.totalorder %s130, %s131
      %p140 = scmp.eq.s32.totalorder %s22, 0
      %p141 = por %p139, %p140
      %p142 = scmp.ne.s32.totalorder %s130, %s131
      %p143 = scmp.eq.s32.totalorder %s23, 1
      %p144 = por %p142, %p143
      %p146 = scmp.ne.s32.totalorder %s131, %s145
      %p147 = scmp.eq.s32.totalorder %s23, 0
      %p148 = por %p146, %p147
      %s150 = sadd.s32 %s149, 1
      %p153 = scmp.eq.s32.totalorder %s17, 1
      %p154 = scmp.ne.s32.totalorder %s149, %s151
      %p155 = scmp.eq.s32.totalorder %s17, 0
      %p156 = por %p154, %p155
      %p157 = scmp.ne.s32.totalorder %s149, %s151
      %p158 = scmp.eq.s32.totalorder %s22, 1
      %p159 = por %p157, %p158
      %p160 = scmp.ne.s32.totalorder %s151, %s152
      %p161 = scmp.eq.s32.totalorder %s22, 0
      %p162 = por %p160, %p161
      %p163 = scmp.ne.s32.totalorder %s151, %s152
      %p164 = scmp.eq.s32.totalorder %s23, 1
      %p165 = por %p163, %p164
      %p167 = scmp.ne.s32.totalorder %s152, %s166
      %p168 = scmp.eq.s32.totalorder %s23, 0
      %p169 = por %p167, %p168
      %s171 = sadd.s32 %s170, 1
      %p174 = scmp.eq.s32.totalorder %s17, 1
      %p175 = scmp.ne.s32.totalorder %s170, %s172
      %p176 = scmp.eq.s32.totalorder %s17, 0
      %p177 = por %p175, %p176
      %p178 = scmp.ne.s32.totalorder %s170, %s172
      %p179 = scmp.eq.s32.totalorder %s22, 1
      %p180 = por %p178, %p179
      %p181 = scmp.ne.s32.totalorder %s172, %s173
      %p182 = scmp.eq.s32.totalorder %s22, 0
      %p183 = por %p181, %p182
      %p184 = scmp.ne.s32.totalorder %s172, %s173
      %p185 = scmp.eq.s32.totalorder %s23, 1
      %p186 = por %p184, %p185
      %p188 = scmp.ne.s32.totalorder %s173, %s187
      %p189 = scmp.eq.s32.totalorder %s23, 0
      %p190 = por %p188, %p189
      %s192 = sadd.s32 %s191, 1
      %p195 = scmp.eq.s32.totalorder %s17, 1
      %p196 = scmp.ne.s32.totalorder %s191, %s193
      %p197 = scmp.eq.s32.totalorder %s17, 0
      %p198 = por %p196, %p197
      %p199 = scmp.ne.s32.totalorder %s191, %s193
      %p200 = scmp.eq.s32.totalorder %s22, 1
      %p201 = por %p199, %p200
      %p202 = scmp.ne.s32.totalorder %s193, %s194
      %p203 = scmp.eq.s32.totalorder %s22, 0
      %p204 = por %p202, %p203
      %p205 = scmp.ne.s32.totalorder %s193, %s194
      %p206 = scmp.eq.s32.totalorder %s23, 1
      %p207 = por %p205, %p206
      %p209 = scmp.ne.s32.totalorder %s194, %s208
      %p210 = scmp.eq.s32.totalorder %s23, 0
      %p211 = por %p209, %p210
      %s212 = ssub.s32 %s24, %s36
      %p213 = scmp.eq.s32.totalorder %s212, 0
      %s215 = sadd.s32 %s214, 1
      %s216 = scalar_select %p213, %s214, %s215
      %p219 = pneg %p213
      %p220 = scmp.eq.s32.totalorder %s17, 1
      %p221 = por %p219, %p220
      %p222 = scmp.ne.s32.totalorder %s214, %s217
      %p223 = scmp.eq.s32.totalorder %s17, 0
      %p224 = por %p222, %p223
      %p225 = scmp.ne.s32.totalorder %s214, %s217
      %p226 = scmp.eq.s32.totalorder %s22, 1
      %p227 = por %p225, %p226
      %p228 = scmp.ne.s32.totalorder %s217, %s218
      %p229 = scmp.eq.s32.totalorder %s22, 0
      %p230 = por %p228, %p229
      %p231 = scmp.ne.s32.totalorder %s217, %s218
      %p232 = scmp.eq.s32.totalorder %s23, 1
      %p233 = por %p231, %p232
      %p235 = scmp.ne.s32.totalorder %s218, %s234
      %p236 = scmp.eq.s32.totalorder %s23, 0
      %p237 = por %p235, %p236
      %p238 = scmp.le.s32.totalorder 1, %s17
      %p239 = scmp.lt.s32.totalorder %s17, 3
      %p240 = pnand %p238, %p239
      %p241 = pneg %p240
      // Predicated region
      $region9: #{tpu_custom_call.1} parent=5 // pred_check
        _
      $region10: #{tpu_custom_call.1} parent=5 // pred_check_branch
        %243 = sbr.rel (%p240) target = $region12
      $region11: #{tpu_custom_call.1} parent=5 // pred_region
        %s244 = ssub.s32 %s17, 1
        // Predicated region
        $region13: #{tpu_custom_call.1} parent=11 // pred_check
          %p245 = pneg %p78
        $region14: #{tpu_custom_call.1} parent=11 // pred_check_branch
          %247 = sbr.rel (%p245) target = $region16
        $region15: #{tpu_custom_call.1} parent=11 // pred_region
          _
        $region16: #{tpu_custom_call.1} parent=11 // pred_fallthru
          _
        // Predicated region
        $region17: #{tpu_custom_call.1} parent=11 // pred_check
          %p248 = pneg %p99
        $region18: #{tpu_custom_call.1} parent=11 // pred_check_branch
          %250 = sbr.rel (%p248) target = $region20
        $region19: #{tpu_custom_call.1} parent=11 // pred_region
          _
        $region20: #{tpu_custom_call.1} parent=11 // pred_fallthru
          _
        // Predicated region
        $region21: #{tpu_custom_call.1} parent=11 // pred_check
          %p251 = pneg %p120
        $region22: #{tpu_custom_call.1} parent=11 // pred_check_branch
          %253 = sbr.rel (%p251) target = $region24
        $region23: #{tpu_custom_call.1} parent=11 // pred_region
          _
        $region24: #{tpu_custom_call.1} parent=11 // pred_fallthru
          _
        // Predicated region
        $region25: #{tpu_custom_call.1} parent=11 // pred_check
          %p254 = pneg %p141
        $region26: #{tpu_custom_call.1} parent=11 // pred_check_branch
          %256 = sbr.rel (%p254) target = $region28
        $region27: #{tpu_custom_call.1} parent=11 // pred_region
          _
        $region28: #{tpu_custom_call.1} parent=11 // pred_fallthru
          _
        // Predicated region
        $region29: #{tpu_custom_call.1} parent=11 // pred_check
          %p257 = pneg %p162
        $region30: #{tpu_custom_call.1} parent=11 // pred_check_branch
          %259 = sbr.rel (%p257) target = $region32
        $region31: #{tpu_custom_call.1} parent=11 // pred_region
          _
        $region32: #{tpu_custom_call.1} parent=11 // pred_fallthru
          _
        // Predicated region
        $region33: #{tpu_custom_call.1} parent=11 // pred_check
          %p260 = pneg %p183
        $region34: #{tpu_custom_call.1} parent=11 // pred_check_branch
          %262 = sbr.rel (%p260) target = $region36
        $region35: #{tpu_custom_call.1} parent=11 // pred_region
          _
        $region36: #{tpu_custom_call.1} parent=11 // pred_fallthru
          _
        // Predicated region
        $region37: #{tpu_custom_call.1} parent=11 // pred_check
          %p263 = pneg %p204
        $region38: #{tpu_custom_call.1} parent=11 // pred_check_branch
          %265 = sbr.rel (%p263) target = $region40
        $region39: #{tpu_custom_call.1} parent=11 // pred_region
          _
        $region40: #{tpu_custom_call.1} parent=11 // pred_fallthru
          _
      $region12: #{tpu_custom_call.1} parent=5 // pred_fallthru
        _
      %p266 = scmp.lt.s32.totalorder %s17, 2
      // Predicated region
      $region41: #{tpu_custom_call.1} parent=5 // pred_check
        %p267 = pneg %p266
      $region42: #{tpu_custom_call.1} parent=5 // pred_check_branch
        %269 = sbr.rel (%p267) target = $region44
      $region43: #{tpu_custom_call.1} parent=5 // pred_region
        // Predicated region
        $region45: #{tpu_custom_call.1} parent=43 // pred_check
          %p270 = pneg %p51
        $region46: #{tpu_custom_call.1} parent=43 // pred_check_branch
          %272 = sbr.rel (%p270) target = $region48
        $region47: #{tpu_custom_call.1} parent=43 // pred_region
          %s273 = smul.u32 2, %s25
          %p274 = scmp.lt.s32.totalorder %s24, 1
          %s275 = scalar_select %p274, %s24, 1
          %p276 = scmp.lt.s32.totalorder %s273, 1
          %s277 = scalar_select %p276, %s273, 1
          %s278 = smul.addr %s275, 2
          %s279 = sadd.s32 %s277, %s278
          %s280 = smul.addr %s279, 4
          %s281 = scalar_lea.vmem %s0, %s280
          %s282 = smul.u32 2, %s25
        $region48: #{tpu_custom_call.1} parent=43 // pred_fallthru
          _
      $region44: #{tpu_custom_call.1} parent=5 // pred_fallthru
        _
      %p283 = scmp.le.s32.totalorder 1, %s17
      %p284 = scmp.lt.s32.totalorder %s17, 3
      %p285 = pnand %p283, %p284
      %p286 = pneg %p285
      // Predicated region
      $region49: #{tpu_custom_call.1} parent=5 // pred_check
        _
      $region50: #{tpu_custom_call.1} parent=5 // pred_check_branch
        %288 = sbr.rel (%p285) target = $region52
      $region51: #{tpu_custom_call.1} parent=5 // pred_region
        %s289 = ssub.s32 %s17, 1
        %s290 = smul.u32 2, %s27
        %p291 = scmp.lt.s32.totalorder %s26, 1
        %s292 = scalar_select %p291, %s26, 1
        %p293 = scmp.lt.s32.totalorder %s290, 1
        %s294 = scalar_select %p293, %s290, 1
        %s295 = smul.addr %s292, 2
        %s296 = sadd.s32 %s294, %s295
        %s297 = smul.addr %s296, 4
        %s298 = scalar_lea.vmem %s0, %s297
        %p299 = pneg %p57
        %p300 = pneg %p54
        %p301 = pneg %p78
        %p302 = pneg %p75
        %p303 = pneg %p99
        %p304 = pneg %p96
        %p305 = pneg %p120
        %p306 = pneg %p117
        %p307 = pneg %p141
        %p308 = pneg %p138
        %p309 = pneg %p162
        %p310 = pneg %p159
        %p311 = pneg %p183
        %p312 = pneg %p180
        %p313 = pneg %p204
        %p314 = pneg %p201
        %p315 = pneg %p230
        %p316 = pneg %p227
        %s317 = sand.u32 %s217, 1
        %s318 = scalar_lea.sflag [#allocation4], %s317
        %s319 = sand.u32 %s217, 1
        %s320 = scalar_lea.vmem [#allocation3], %s319
        %s321 = smul.u32 2, %s27
        %p322 = scmp.lt.s32.totalorder %s26, 1
        %s323 = scalar_select %p322, %s26, 1
        %p324 = scmp.lt.s32.totalorder %s321, 1
        %s325 = scalar_select %p324, %s321, 1
        %s326 = smul.addr %s323, 2
        %s327 = sadd.s32 %s325, %s326
        %s328 = smul.addr %s327, 4
        %s329 = scalar_lea.vmem %s0, %s328
        %s330 = smul.u32 2, %s27
        %p331 = scmp.eq.s32.totalorder %s27, 0
        // Predicated region
        $region53: #{tpu_custom_call.1} parent=51 // pred_check
          %p332 = pneg %p331
        $region54: #{tpu_custom_call.1} parent=51 // pred_check_branch
          %334 = sbr.rel (%p332) target = $region56
        $region55: #{tpu_custom_call.1} parent=51 // pred_region
          %335 = vst [vmem:[#allocation2] sm:$0xff] 0.0
          %336 = vst [vmem:[#allocation2 + $0x8] sm:$0xff] 0.0
          %337 = vst [vmem:[#allocation2 + $0x10] sm:$0xff] 0.0
          %338 = vst [vmem:[#allocation2 + $0x18] sm:$0xff] 0.0
          %339 = vst [vmem:[#allocation2 + $0x20] sm:$0xff] 0.0
          %340 = vst [vmem:[#allocation2 + $0x28] sm:$0xff] 0.0
          %341 = vst [vmem:[#allocation2 + $0x30] sm:$0xff] 0.0
          %342 = vst [vmem:[#allocation2 + $0x38] sm:$0xff] 0.0
          %343 = vst [vmem:[#allocation2 + $0x40] sm:$0xff] 0.0
          %344 = vst [vmem:[#allocation2 + $0x48] sm:$0xff] 0.0
        $region56: #{tpu_custom_call.1} parent=51 // pred_fallthru
          _
        %v345 = vld [vmem:[%s329] sm:$0x77]
        %v346 = vld [vmem:[%s1] sm:$0xff]
        %v347 = vld [vmem:[%s1 + $0x8] sm:$0xff]
        %v348 = vld [vmem:[%s1 + $0x10] sm:$0xff]
        %v349 = vld [vmem:[%s1 + $0x18] sm:$0xff]
        %v350 = vld [vmem:[%s1 + $0x20] sm:$0xff]
        %v351 = vld [vmem:[%s1 + $0x28] sm:$0xff]
        %v352 = vld [vmem:[%s1 + $0x30] sm:$0xff]
        %v353 = vld [vmem:[%s1 + $0x38] sm:$0xff]
        %v354 = vld [vmem:[%s1 + $0x40] sm:$0xff]
        %v355 = vld [vmem:[%s1 + $0x48] sm:$0xff]
        %v357 = vcombine.high %v345, %v345
        %vm358 = vcmask 23552
        %v360 = vsel %vm358, %v346, 0
        %v363 = vsel %vm358, %v347, 0
        %v366 = vsel %vm358, %v348, 0
        %v369 = vsel %vm358, %v349, 0
        %v372 = vsel %vm358, %v350, 0
        %v375 = vsel %vm358, %v351, 0
        %v378 = vsel %vm358, %v352, 0
        %v381 = vsel %vm358, %v353, 0
        %v384 = vsel %vm358, %v354, 0
        %v387 = vsel %vm358, %v355, 0
        %vm389 = vcmask 1042432
        %v390 = vsel %vm389, %v345, 0
        %v392 = vsel %vm389, %v357, 0
        %394 = vmatprep.subr.mxu0 %v392
        %395 = vmatpush1.msra.mxu0 %v390
        %396 = vmatprep.subr.mxu0 0.0
        %397 = vmatpush1.msra.mxu0 0.0
        %398 = vmatprep.subr.mxu0 0.0
        %399 = vmatpush1.msra.mxu0 0.0
        %400 = vmatprep.subr.mxu0 0.0
        %401 = vmatpush1.msra.mxu0 0.0
        %402 = vmatprep.subr.mxu0 0.0
        %403 = vmatpush1.msra.mxu0 0.0
        %404 = vmatprep.subr.mxu0 0.0
        %405 = vmatpush1.msra.mxu0 0.0
        %406 = vmatprep.subr.mxu0 0.0
        %407 = vmatpush1.msra.mxu0 0.0
        %408 = vmatprep.subr.mxu0 0.0
        %409 = vmatpush1.msra.mxu0 0.0
        %410 = vmatprep.subr.mxu0 0.0
        %411 = vmatpush1.msra.mxu0 0.0
        %412 = vmatprep.subr.mxu0 0.0
        %413 = vmatpush1.msra.mxu0 0.0
        %414 = vmatprep.subr.mxu0 0.0
        %415 = vmatpush1.msra.mxu0 0.0
        %416 = vmatprep.subr.mxu0 0.0
        %417 = vmatpush1.msra.mxu0 0.0
        %418 = vmatprep.subr.mxu0 0.0
        %419 = vmatpush1.msra.mxu0 0.0
        %420 = vmatprep.subr.mxu0 0.0
        %421 = vmatpush1.msra.mxu0 0.0
        %422 = vmatprep.subr.mxu0 0.0
        %423 = vmatpush1.msra.mxu0 0.0
        %424 = vmatprep.subr.mxu0 0.0
        %425 = vmatpush1.msra.mxu0 0.0
        %426 = vmatprep.subr.mxu0 0.0
        %427 = vmatpush1.msra.mxu0 0.0
        %428 = vmatprep.subr.mxu0 0.0
        %429 = vmatpush1.msra.mxu0 0.0
        %430 = vmatprep.subr.mxu0 0.0
        %431 = vmatpush1.msra.mxu0 0.0
        %432 = vmatprep.subr.mxu0 0.0
        %433 = vmatpush1.msra.mxu0 0.0
        %434 = vmatprep.subr.mxu0 0.0
        %435 = vmatpush1.msra.mxu0 0.0
        %436 = vmatprep.subr.mxu0 0.0
        %437 = vmatpush1.msra.mxu0 0.0
        %438 = vmatprep.subr.mxu0 0.0
        %439 = vmatpush1.msra.mxu0 0.0
        %440 = vmatprep.subr.mxu0 0.0
        %441 = vmatpush1.msra.mxu0 0.0
        %442 = vmatprep.subr.mxu0 0.0
        %443 = vmatpush1.msra.mxu0 0.0
        %444 = vmatprep.subr.mxu0 0.0
        %445 = vmatpush1.msra.mxu0 0.0
        %446 = vmatprep.subr.mxu0 0.0
        %447 = vmatpush1.msra.mxu0 0.0
        %448 = vmatprep.subr.mxu0 0.0
        %449 = vmatpush1.msra.mxu0 0.0
        %450 = vmatprep.subr.mxu0 0.0
        %451 = vmatpush1.msra.mxu0 0.0
        %452 = vmatprep.subr.mxu0 0.0
        %453 = vmatpush1.msra.mxu0 0.0
        %454 = vmatprep.subr.mxu0 0.0
        %455 = vmatpush1.msra.mxu0 0.0
        %456 = vmatprep.subr.mxu0 0.0
        %457 = vmatpush1.msra.mxu0 0.0
        %458 = vmatprep.mubr.f32.mxu0 0.0
        %459 = vmatmul.mubr.f32.gmra.mrb[0].mxu0 %v360
        %v460 = vpop.f32.mrb[0].mxu0
        %v461 = vadd.f32 0.0, %v460
        %v462 = vpop.f32.mrb[0].mxu0
        %v463 = vadd.f32 0.0, %v462
        %464 = vmatprep.mubr.f32.mxu0 0.0
        %465 = vmatmul.mubr.f32.gmra.mrb[0].mxu0 %v363
        %v466 = vpop.f32.mrb[0].mxu0
        %v467 = vadd.f32 0.0, %v466
        %v468 = vpop.f32.mrb[0].mxu0
        %v469 = vadd.f32 0.0, %v468
        %470 = vmatprep.mubr.f32.mxu0 0.0
        %471 = vmatmul.mubr.f32.gmra.mrb[0].mxu0 %v366
        %v472 = vpop.f32.mrb[0].mxu0
        %v473 = vadd.f32 0.0, %v472
        %v474 = vpop.f32.mrb[0].mxu0
        %v475 = vadd.f32 0.0, %v474
        %476 = vmatprep.mubr.f32.mxu0 0.0
        %477 = vmatmul.mubr.f32.gmra.mrb[0].mxu0 %v369
        %v478 = vpop.f32.mrb[0].mxu0
        %v479 = vadd.f32 0.0, %v478
        %v480 = vpop.f32.mrb[0].mxu0
        %v481 = vadd.f32 0.0, %v480
        %482 = vmatprep.mubr.f32.mxu0 0.0
        %483 = vmatmul.mubr.f32.gmra.mrb[0].mxu0 %v372
        %v484 = vpop.f32.mrb[0].mxu0
        %v485 = vadd.f32 0.0, %v484
        %v486 = vpop.f32.mrb[0].mxu0
        %v487 = vadd.f32 0.0, %v486
        %488 = vmatprep.mubr.f32.mxu0 0.0
        %489 = vmatmul.mubr.f32.gmra.mrb[0].mxu0 %v375
        %v490 = vpop.f32.mrb[0].mxu0
        %v491 = vadd.f32 0.0, %v490
        %v492 = vpop.f32.mrb[0].mxu0
        %v493 = vadd.f32 0.0, %v492
        %494 = vmatprep.mubr.f32.mxu0 0.0
        %495 = vmatmul.mubr.f32.gmra.mrb[0].mxu0 %v378
        %v496 = vpop.f32.mrb[0].mxu0
        %v497 = vadd.f32 0.0, %v496
        %v498 = vpop.f32.mrb[0].mxu0
        %v499 = vadd.f32 0.0, %v498
        %500 = vmatprep.mubr.f32.mxu0 0.0
        %501 = vmatmul.mubr.f32.gmra.mrb[0].mxu0 %v381
        %v502 = vpop.f32.mrb[0].mxu0
        %v503 = vadd.f32 0.0, %v502
        %v504 = vpop.f32.mrb[0].mxu0
        %v505 = vadd.f32 0.0, %v504
        %506 = vmatprep.mubr.f32.mxu0 0.0
        %507 = vmatmul.mubr.f32.gmra.mrb[0].mxu0 %v384
        %v508 = vpop.f32.mrb[0].mxu0
        %v509 = vadd.f32 0.0, %v508
        %v510 = vpop.f32.mrb[0].mxu0
        %v511 = vadd.f32 0.0, %v510
        %512 = vmatprep.mubr.f32.mxu0 0.0
        %513 = vmatmul.mubr.f32.gmra.mrb[0].mxu0 %v387
        %v514 = vpop.f32.mrb[0].mxu0
        %v515 = vadd.f32 0.0, %v514
        %v516 = vpop.f32.mrb[0].mxu0
        %v517 = vadd.f32 0.0, %v516
        %518 = vdwg.mxu0
        %v519 = vld [vmem:[%s2] sm:$0xff]
        %v520 = vld [vmem:[%s2 + $0x8] sm:$0xff]
        %v521 = vld [vmem:[%s2 + $0x10] sm:$0xff]
        %v522 = vld [vmem:[%s2 + $0x18] sm:$0xff]
        %v523 = vld [vmem:[%s2 + $0x20] sm:$0xff]
        %v524 = vld [vmem:[%s2 + $0x28] sm:$0xff]
        %v525 = vld [vmem:[%s2 + $0x30] sm:$0xff]
        %v526 = vld [vmem:[%s2 + $0x38] sm:$0xff]
        %v527 = vld [vmem:[%s2 + $0x40] sm:$0xff]
        %v528 = vld [vmem:[%s2 + $0x48] sm:$0xff]
        %530 = vset.pattern.permute.xlu0 0
        %531 = vperm.xlu0 %530, %v519
        %v532 = vpop.permute.xlu0 %531
        %535 = vset.pattern.permute.xlu0 0
        %536 = vperm.xlu0 %535, %v520
        %v537 = vpop.permute.xlu0 %536
        %540 = vset.pattern.permute.xlu0 0
        %541 = vperm.xlu0 %540, %v521
        %v542 = vpop.permute.xlu0 %541
        %545 = vset.pattern.permute.xlu0 0
        %546 = vperm.xlu0 %545, %v522
        %v547 = vpop.permute.xlu0 %546
        %550 = vset.pattern.permute.xlu0 0
        %551 = vperm.xlu0 %550, %v523
        %v552 = vpop.permute.xlu0 %551
        %555 = vset.pattern.permute.xlu0 0
        %556 = vperm.xlu0 %555, %v524
        %v557 = vpop.permute.xlu0 %556
        %560 = vset.pattern.permute.xlu0 0
        %561 = vperm.xlu0 %560, %v525
        %v562 = vpop.permute.xlu0 %561
        %565 = vset.pattern.permute.xlu0 0
        %566 = vperm.xlu0 %565, %v526
        %v567 = vpop.permute.xlu0 %566
        %570 = vset.pattern.permute.xlu0 0
        %571 = vperm.xlu0 %570, %v527
        %v572 = vpop.permute.xlu0 %571
        %575 = vset.pattern.permute.xlu0 0
        %576 = vperm.xlu0 %575, %v528
        %v577 = vpop.permute.xlu0 %576
        %v579 = vadd.f32 %v461, %v532
        %v580 = vadd.f32 %v467, %v537
        %v581 = vadd.f32 %v473, %v542
        %v582 = vadd.f32 %v479, %v547
        %v583 = vadd.f32 %v485, %v552
        %v584 = vadd.f32 %v491, %v557
        %v585 = vadd.f32 %v497, %v562
        %v586 = vadd.f32 %v503, %v567
        %v587 = vadd.f32 %v509, %v572
        %v588 = vadd.f32 %v515, %v577
        %v589 = vmax.f32 %v579, 1e-06
        %v590 = vmax.f32 %v580, 1e-06
        %v591 = vmax.f32 %v581, 1e-06
        %v592 = vmax.f32 %v582, 1e-06
        %v593 = vmax.f32 %v583, 1e-06
        %v594 = vmax.f32 %v584, 1e-06
        %v595 = vmax.f32 %v585, 1e-06
        %v596 = vmax.f32 %v586, 1e-06
        %v597 = vmax.f32 %v587, 1e-06
        %v598 = vmax.f32 %v588, 1e-06
        %v599 = vmul.f32 %v589, %v589
        %v600 = vmul.f32 %v590, %v590
        %v601 = vmul.f32 %v591, %v591
        %v602 = vmul.f32 %v592, %v592
        %v603 = vmul.f32 %v593, %v593
        %v604 = vmul.f32 %v594, %v594
        %v605 = vmul.f32 %v595, %v595
        %v606 = vmul.f32 %v596, %v596
        %v607 = vmul.f32 %v597, %v597
        %v608 = vmul.f32 %v598, %v598
        %v609 = vmul.f32 %v599, %v589
        %v610 = vmul.f32 %v600, %v590
        %v611 = vmul.f32 %v601, %v591
        %v612 = vmul.f32 %v602, %v592
        %v613 = vmul.f32 %v603, %v593
        %v614 = vmul.f32 %v604, %v594
        %v615 = vmul.f32 %v605, %v595
        %v616 = vmul.f32 %v606, %v596
        %v617 = vmul.f32 %v607, %v597
        %v618 = vmul.f32 %v608, %v598
        %v619 = vadd.f32 %v463, %v532
        %v620 = vadd.f32 %v469, %v537
        %v621 = vadd.f32 %v475, %v542
        %v622 = vadd.f32 %v481, %v547
        %v623 = vadd.f32 %v487, %v552
        %v624 = vadd.f32 %v493, %v557
        %v625 = vadd.f32 %v499, %v562
        %v626 = vadd.f32 %v505, %v567
        %v627 = vadd.f32 %v511, %v572
        %v628 = vadd.f32 %v517, %v577
        %v629 = vmax.f32 %v619, 1e-06
        %v630 = vmax.f32 %v620, 1e-06
        %v631 = vmax.f32 %v621, 1e-06
        %v632 = vmax.f32 %v622, 1e-06
        %v633 = vmax.f32 %v623, 1e-06
        %v634 = vmax.f32 %v624, 1e-06
        %v635 = vmax.f32 %v625, 1e-06
        %v636 = vmax.f32 %v626, 1e-06
        %v637 = vmax.f32 %v627, 1e-06
        %v638 = vmax.f32 %v628, 1e-06
        %v639 = vmul.f32 %v629, %v629
        %v640 = vmul.f32 %v630, %v630
        %v641 = vmul.f32 %v631, %v631
        %v642 = vmul.f32 %v632, %v632
        %v643 = vmul.f32 %v633, %v633
        %v644 = vmul.f32 %v634, %v634
        %v645 = vmul.f32 %v635, %v635
        %v646 = vmul.f32 %v636, %v636
        %v647 = vmul.f32 %v637, %v637
        %v648 = vmul.f32 %v638, %v638
        %v649 = vmul.f32 %v639, %v629
        %v650 = vmul.f32 %v640, %v630
        %v651 = vmul.f32 %v641, %v631
        %v652 = vmul.f32 %v642, %v632
        %v653 = vmul.f32 %v643, %v633
        %v654 = vmul.f32 %v644, %v634
        %v655 = vmul.f32 %v645, %v635
        %v656 = vmul.f32 %v646, %v636
        %v657 = vmul.f32 %v647, %v637
        %v658 = vmul.f32 %v648, %v638
        %v659 = vadd.f32 %v609, %v649
        %v660 = vadd.f32 %v610, %v650
        %v661 = vadd.f32 %v611, %v651
        %v662 = vadd.f32 %v612, %v652
        %v663 = vadd.f32 %v613, %v653
        %v664 = vadd.f32 %v614, %v654
        %v665 = vadd.f32 %v615, %v655
        %v666 = vadd.f32 %v616, %v656
        %v667 = vadd.f32 %v617, %v657
        %v668 = vadd.f32 %v618, %v658
        %v669 = vld [vmem:[#allocation2] sm:$0xff]
        %v670 = vld [vmem:[#allocation2 + $0x8] sm:$0xff]
        %v671 = vld [vmem:[#allocation2 + $0x10] sm:$0xff]
        %v672 = vld [vmem:[#allocation2 + $0x18] sm:$0xff]
        %v673 = vld [vmem:[#allocation2 + $0x20] sm:$0xff]
        %v674 = vld [vmem:[#allocation2 + $0x28] sm:$0xff]
        %v675 = vld [vmem:[#allocation2 + $0x30] sm:$0xff]
        %v676 = vld [vmem:[#allocation2 + $0x38] sm:$0xff]
        %v677 = vld [vmem:[#allocation2 + $0x40] sm:$0xff]
        %v678 = vld [vmem:[#allocation2 + $0x48] sm:$0xff]
        %v679 = vadd.f32 %v669, %v659
        %v680 = vadd.f32 %v670, %v660
        %v681 = vadd.f32 %v671, %v661
        %v682 = vadd.f32 %v672, %v662
        %v683 = vadd.f32 %v673, %v663
        %v684 = vadd.f32 %v674, %v664
        %v685 = vadd.f32 %v675, %v665
        %v686 = vadd.f32 %v676, %v666
        %v687 = vadd.f32 %v677, %v667
        %v688 = vadd.f32 %v678, %v668
        %689 = vst [vmem:[#allocation2] sm:$0xff] %v679
        %690 = vst [vmem:[#allocation2 + $0x8] sm:$0xff] %v680
        %691 = vst [vmem:[#allocation2 + $0x10] sm:$0xff] %v681
        %692 = vst [vmem:[#allocation2 + $0x18] sm:$0xff] %v682
        %693 = vst [vmem:[#allocation2 + $0x20] sm:$0xff] %v683
        %694 = vst [vmem:[#allocation2 + $0x28] sm:$0xff] %v684
        %695 = vst [vmem:[#allocation2 + $0x30] sm:$0xff] %v685
        %696 = vst [vmem:[#allocation2 + $0x38] sm:$0xff] %v686
        %697 = vst [vmem:[#allocation2 + $0x40] sm:$0xff] %v687
        %698 = vst [vmem:[#allocation2 + $0x48] sm:$0xff] %v688
        // Predicated region
        $region57: #{tpu_custom_call.1} parent=51 // pred_check
          %p699 = pneg %p331
        $region58: #{tpu_custom_call.1} parent=51 // pred_check_branch
          %701 = sbr.rel (%p699) target = $region60
        $region59: #{tpu_custom_call.1} parent=51 // pred_region
          %v702 = vld [vmem:[#allocation2] sm:$0xff]
          %v703 = vld [vmem:[#allocation2 + $0x8] sm:$0xff]
          %v704 = vld [vmem:[#allocation2 + $0x10] sm:$0xff]
          %v705 = vld [vmem:[#allocation2 + $0x18] sm:$0xff]
          %v706 = vld [vmem:[#allocation2 + $0x20] sm:$0xff]
          %v707 = vld [vmem:[#allocation2 + $0x28] sm:$0xff]
          %v708 = vld [vmem:[#allocation2 + $0x30] sm:$0xff]
          %v709 = vld [vmem:[#allocation2 + $0x38] sm:$0xff]
          %v710 = vld [vmem:[#allocation2 + $0x40] sm:$0xff]
          %v711 = vld [vmem:[#allocation2 + $0x48] sm:$0xff]
          %712 = vadd.xlane.f32.xlu0 %v702
          %v713 = vpop.xlane.xlu0 %712
          %714 = vadd.xlane.f32.xlu0 %v703
          %v715 = vpop.xlane.xlu0 %714
          %716 = vadd.xlane.f32.xlu0 %v704
          %v717 = vpop.xlane.xlu0 %716
          %718 = vadd.xlane.f32.xlu0 %v705
          %v719 = vpop.xlane.xlu0 %718
          %720 = vadd.xlane.f32.xlu0 %v706
          %v721 = vpop.xlane.xlu0 %720
          %722 = vadd.xlane.f32.xlu0 %v707
          %v723 = vpop.xlane.xlu0 %722
          %724 = vadd.xlane.f32.xlu0 %v708
          %v725 = vpop.xlane.xlu0 %724
          %726 = vadd.xlane.f32.xlu0 %v709
          %v727 = vpop.xlane.xlu0 %726
          %728 = vadd.xlane.f32.xlu0 %v710
          %v729 = vpop.xlane.xlu0 %728
          %730 = vadd.xlane.f32.xlu0 %v711
          %v731 = vpop.xlane.xlu0 %730
          %v732 = vld [vmem:[%s7] sm:$0x1]
          %v734 = vlaneseq
          %v735 = vshrl.u32 %v734, 7
          %v736 = vsub.s32 0, %v735
          %v737 = vrot.slane %v732, %v736
          %739 = vbcast.lane.b32.xlu0 %v737, 256
          %v740 = vpop.permute.xlu0 %739
          %s742 = sor.u32 256, 8
          %743 = vbcast.lane.b32.xlu0 %v737, %s742
          %v744 = vpop.permute.xlu0 %743
          %s746 = sor.u32 256, 16
          %747 = vbcast.lane.b32.xlu0 %v737, %s746
          %v748 = vpop.permute.xlu0 %747
          %s750 = sor.u32 256, 24
          %751 = vbcast.lane.b32.xlu0 %v737, %s750
          %v752 = vpop.permute.xlu0 %751
          %s754 = sor.u32 256, 32
          %755 = vbcast.lane.b32.xlu0 %v737, %s754
          %v756 = vpop.permute.xlu0 %755
          %s758 = sor.u32 256, 40
          %759 = vbcast.lane.b32.xlu0 %v737, %s758
          %v760 = vpop.permute.xlu0 %759
          %s762 = sor.u32 256, 48
          %763 = vbcast.lane.b32.xlu0 %v737, %s762
          %v764 = vpop.permute.xlu0 %763
          %s766 = sor.u32 256, 56
          %767 = vbcast.lane.b32.xlu0 %v737, %s766
          %v768 = vpop.permute.xlu0 %767
          %s770 = sor.u32 256, 64
          %771 = vbcast.lane.b32.xlu0 %v737, %s770
          %v772 = vpop.permute.xlu0 %771
          %s774 = sor.u32 256, 72
          %775 = vbcast.lane.b32.xlu0 %v737, %s774
          %v776 = vpop.permute.xlu0 %775
          %v787 = vsub.f32 %v713, %v740
          %v788 = vsub.f32 %v715, %v744
          %v789 = vsub.f32 %v717, %v748
          %v790 = vsub.f32 %v719, %v752
          %v791 = vsub.f32 %v721, %v756
          %v792 = vsub.f32 %v723, %v760
          %v793 = vsub.f32 %v725, %v764
          %v794 = vsub.f32 %v727, %v768
          %v795 = vsub.f32 %v729, %v772
          %v796 = vsub.f32 %v731, %v776
          %v797 = vmul.f32 %v787, 0.00390625
          %v798 = vmul.f32 %v788, 0.00390625
          %v799 = vmul.f32 %v789, 0.00390625
          %v800 = vmul.f32 %v790, 0.00390625
          %v801 = vmul.f32 %v791, 0.00390625
          %v802 = vmul.f32 %v792, 0.00390625
          %v803 = vmul.f32 %v793, 0.00390625
          %v804 = vmul.f32 %v794, 0.00390625
          %v805 = vmul.f32 %v795, 0.00390625
          %v806 = vmul.f32 %v796, 0.00390625
          %v807 = vmax.f32 %v797, 1e-18
          %v808 = vmax.f32 %v798, 1e-18
          %v809 = vmax.f32 %v799, 1e-18
          %v810 = vmax.f32 %v800, 1e-18
          %v811 = vmax.f32 %v801, 1e-18
          %v812 = vmax.f32 %v802, 1e-18
          %v813 = vmax.f32 %v803, 1e-18
          %v814 = vmax.f32 %v804, 1e-18
          %v815 = vmax.f32 %v805, 1e-18
          %v816 = vmax.f32 %v806, 1e-18
          %v817 = vpow.f32 %v807, 0.33333334
          %v818 = vpow.f32 %v808, 0.33333334
          %v819 = vpow.f32 %v809, 0.33333334
          %v820 = vpow.f32 %v810, 0.33333334
          %v821 = vpow.f32 %v811, 0.33333334
          %v822 = vpow.f32 %v812, 0.33333334
          %v823 = vpow.f32 %v813, 0.33333334
          %v824 = vpow.f32 %v814, 0.33333334
          %v825 = vpow.f32 %v815, 0.33333334
          %v826 = vpow.f32 %v816, 0.33333334
          %v827 = vmul.f32 %v817, %v817
          %v828 = vmul.f32 %v818, %v818
          %v829 = vmul.f32 %v819, %v819
          %v830 = vmul.f32 %v820, %v820
          %v831 = vmul.f32 %v821, %v821
          %v832 = vmul.f32 %v822, %v822
          %v833 = vmul.f32 %v823, %v823
          %v834 = vmul.f32 %v824, %v824
          %v835 = vmul.f32 %v825, %v825
          %v836 = vmul.f32 %v826, %v826
          %v837 = vld [vmem:[%s3] sm:$0xff]
          %v838 = vld [vmem:[%s3 + $0x8] sm:$0xff]
          %v839 = vld [vmem:[%s3 + $0x10] sm:$0xff]
          %v840 = vld [vmem:[%s3 + $0x18] sm:$0xff]
          %v841 = vld [vmem:[%s3 + $0x20] sm:$0xff]
          %v842 = vld [vmem:[%s3 + $0x28] sm:$0xff]
          %v843 = vld [vmem:[%s3 + $0x30] sm:$0xff]
          %v844 = vld [vmem:[%s3 + $0x38] sm:$0xff]
          %v845 = vld [vmem:[%s3 + $0x40] sm:$0xff]
          %v846 = vld [vmem:[%s3 + $0x48] sm:$0xff]
          %857 = vset.pattern.permute.xlu0 0
          %858 = vperm.xlu0 %857, %v827
          %v859 = vpop.permute.xlu0 %858
          %860 = vset.pattern.permute.xlu0 0
          %861 = vperm.xlu0 %860, %v828
          %v862 = vpop.permute.xlu0 %861
          %863 = vset.pattern.permute.xlu0 0
          %864 = vperm.xlu0 %863, %v829
          %v865 = vpop.permute.xlu0 %864
          %866 = vset.pattern.permute.xlu0 0
          %867 = vperm.xlu0 %866, %v830
          %v868 = vpop.permute.xlu0 %867
          %869 = vset.pattern.permute.xlu0 0
          %870 = vperm.xlu0 %869, %v831
          %v871 = vpop.permute.xlu0 %870
          %872 = vset.pattern.permute.xlu0 0
          %873 = vperm.xlu0 %872, %v832
          %v874 = vpop.permute.xlu0 %873
          %875 = vset.pattern.permute.xlu0 0
          %876 = vperm.xlu0 %875, %v833
          %v877 = vpop.permute.xlu0 %876
          %878 = vset.pattern.permute.xlu0 0
          %879 = vperm.xlu0 %878, %v834
          %v880 = vpop.permute.xlu0 %879
          %881 = vset.pattern.permute.xlu0 0
          %882 = vperm.xlu0 %881, %v835
          %v883 = vpop.permute.xlu0 %882
          %884 = vset.pattern.permute.xlu0 0
          %885 = vperm.xlu0 %884, %v836
          %v886 = vpop.permute.xlu0 %885
          %v887 = vlaneseq
          %v888 = vand.u32 %v887, 127
          %v889 = vlaneseq
          %v890 = vshrl.u32 %v889, 7
          %v891 = vsub.s32 %v888, %v890
          %v892 = vrot.slane %v859, %v891
          %v893 = vadd.s32 %v888, 4294967288
          %v894 = vlaneseq
          %v895 = vshrl.u32 %v894, 7
          %v896 = vsub.s32 %v893, %v895
          %v897 = vrot.slane %v862, %v896
          %vm898 = vcmask 130112
          %v899 = vsel %vm898, %v897, %v892
          %v900 = vadd.s32 %v888, 4294967280
          %v901 = vlaneseq
          %v902 = vshrl.u32 %v901, 7
          %v903 = vsub.s32 %v900, %v902
          %v904 = vrot.slane %v865, %v903
          %vm905 = vcmask 195712
          %v906 = vsel %vm905, %v904, %v899
          %v907 = vadd.s32 %v888, 4294967272
          %v908 = vlaneseq
          %v909 = vshrl.u32 %v908, 7
          %v910 = vsub.s32 %v907, %v909
          %v911 = vrot.slane %v868, %v910
          %vm912 = vcmask 261312
          %v913 = vsel %vm912, %v911, %v906
          %v914 = vadd.s32 %v888, 4294967264
          %v915 = vlaneseq
          %v916 = vshrl.u32 %v915, 7
          %v917 = vsub.s32 %v914, %v916
          %v918 = vrot.slane %v871, %v917
          %vm919 = vcmask 326912
          %v920 = vsel %vm919, %v918, %v913
          %v921 = vadd.s32 %v888, 4294967256
          %v922 = vlaneseq
          %v923 = vshrl.u32 %v922, 7
          %v924 = vsub.s32 %v921, %v923
          %v925 = vrot.slane %v874, %v924
          %vm926 = vcmask 392512
          %v927 = vsel %vm926, %v925, %v920
          %v928 = vadd.s32 %v888, 4294967248
          %v929 = vlaneseq
          %v930 = vshrl.u32 %v929, 7
          %v931 = vsub.s32 %v928, %v930
          %v932 = vrot.slane %v877, %v931
          %vm933 = vcmask 458112
          %v934 = vsel %vm933, %v932, %v927
          %v935 = vadd.s32 %v888, 4294967240
          %v936 = vlaneseq
          %v937 = vshrl.u32 %v936, 7
          %v938 = vsub.s32 %v935, %v937
          %v939 = vrot.slane %v880, %v938
          %vm940 = vcmask 523712
          %v941 = vsel %vm940, %v939, %v934
          %v942 = vadd.s32 %v888, 4294967232
          %v943 = vlaneseq
          %v944 = vshrl.u32 %v943, 7
          %v945 = vsub.s32 %v942, %v944
          %v946 = vrot.slane %v883, %v945
          %vm947 = vcmask 589312
          %v948 = vsel %vm947, %v946, %v941
          %v949 = vadd.s32 %v888, 4294967224
          %v950 = vlaneseq
          %v951 = vshrl.u32 %v950, 7
          %v952 = vsub.s32 %v949, %v951
          %v953 = vrot.slane %v886, %v952
          %vm954 = vcmask 654912
          %v955 = vsel %vm954, %v953, %v948
          %vm956 = vcmask 654336
          %v957 = vsel %vm956, %v955, 0
          %959 = vmatprep.subr.mxu0 0.0
          %960 = vmatpush1.msra.mxu0 %v837
          %961 = vmatprep.subr.mxu0 0.0
          %962 = vmatpush1.msra.mxu0 %v838
          %963 = vmatprep.subr.mxu0 0.0
          %964 = vmatpush1.msra.mxu0 %v839
          %965 = vmatprep.subr.mxu0 0.0
          %966 = vmatpush1.msra.mxu0 %v840
          %967 = vmatprep.subr.mxu0 0.0
          %968 = vmatpush1.msra.mxu0 %v841
          %969 = vmatprep.subr.mxu0 0.0
          %970 = vmatpush1.msra.mxu0 %v842
          %971 = vmatprep.subr.mxu0 0.0
          %972 = vmatpush1.msra.mxu0 %v843
          %973 = vmatprep.subr.mxu0 0.0
          %974 = vmatpush1.msra.mxu0 %v844
          %975 = vmatprep.subr.mxu0 0.0
          %976 = vmatpush1.msra.mxu0 %v845
          %977 = vmatprep.subr.mxu0 0.0
          %978 = vmatpush1.msra.mxu0 %v846
          %979 = vmatprep.subr.mxu0 0.0
          %980 = vmatpush1.msra.mxu0 0.0
          %981 = vmatprep.subr.mxu0 0.0
          %982 = vmatpush1.msra.mxu0 0.0
          %983 = vmatprep.subr.mxu0 0.0
          %984 = vmatpush1.msra.mxu0 0.0
          %985 = vmatprep.subr.mxu0 0.0
          %986 = vmatpush1.msra.mxu0 0.0
          %987 = vmatprep.subr.mxu0 0.0
          %988 = vmatpush1.msra.mxu0 0.0
          %989 = vmatprep.subr.mxu0 0.0
          %990 = vmatpush1.msra.mxu0 0.0
          %991 = vmatprep.subr.mxu0 0.0
          %992 = vmatpush1.msra.mxu0 0.0
          %993 = vmatprep.subr.mxu0 0.0
          %994 = vmatpush1.msra.mxu0 0.0
          %995 = vmatprep.subr.mxu0 0.0
          %996 = vmatpush1.msra.mxu0 0.0
          %997 = vmatprep.subr.mxu0 0.0
          %998 = vmatpush1.msra.mxu0 0.0
          %999 = vmatprep.subr.mxu0 0.0
          %1000 = vmatpush1.msra.mxu0 0.0
          %1001 = vmatprep.subr.mxu0 0.0
          %1002 = vmatpush1.msra.mxu0 0.0
          %1003 = vmatprep.subr.mxu0 0.0
          %1004 = vmatpush1.msra.mxu0 0.0
          %1005 = vmatprep.subr.mxu0 0.0
          %1006 = vmatpush1.msra.mxu0 0.0
          %1007 = vmatprep.subr.mxu0 0.0
          %1008 = vmatpush1.msra.mxu0 0.0
          %1009 = vmatprep.subr.mxu0 0.0
          %1010 = vmatpush1.msra.mxu0 0.0
          %1011 = vmatprep.subr.mxu0 0.0
          %1012 = vmatpush1.msra.mxu0 0.0
          %1013 = vmatprep.subr.mxu0 0.0
          %1014 = vmatpush1.msra.mxu0 0.0
          %1015 = vmatprep.subr.mxu0 0.0
          %1016 = vmatpush1.msra.mxu0 0.0
          %1017 = vmatprep.subr.mxu0 0.0
          %1018 = vmatpush1.msra.mxu0 0.0
          %1019 = vmatprep.subr.mxu0 0.0
          %1020 = vmatpush1.msra.mxu0 0.0
          %1021 = vmatprep.subr.mxu0 0.0
          %1022 = vmatpush1.msra.mxu0 0.0
          %1023 = vmatprep.mubr.f32.mxu0 0.0
          %1024 = vmatmul.mubr.f32.gmra.mrb[0].mxu0 %v957
          %v1025 = vpop.f32.mrb[0].mxu0
          %v1026 = vadd.f32 0.0, %v1025
          %v1027 = vpop.f32.mrb[0].mxu0
          %1028 = vdwg.mxu0
          %v1029 = vld [vmem:[%s4] sm:$0x3]
          %vm1030 = vcmask 15360
          %v1032 = vsel %vm1030, %v1026, 0
          %vm1034 = vcmask 1041408
          %v1036 = vsel %vm1034, %v1029, 0
          %1038 = vmatprep.subr.mxu0 0.0
          %1039 = vmatpush1.msra.mxu0 %v1036
          %1040 = vmatprep.subr.mxu0 0.0
          %1041 = vmatpush1.msra.mxu0 0.0
          %1042 = vmatprep.subr.mxu0 0.0
          %1043 = vmatpush1.msra.mxu0 0.0
          %1044 = vmatprep.subr.mxu0 0.0
          %1045 = vmatpush1.msra.mxu0 0.0
          %1046 = vmatprep.subr.mxu0 0.0
          %1047 = vmatpush1.msra.mxu0 0.0
          %1048 = vmatprep.subr.mxu0 0.0
          %1049 = vmatpush1.msra.mxu0 0.0
          %1050 = vmatprep.subr.mxu0 0.0
          %1051 = vmatpush1.msra.mxu0 0.0
          %1052 = vmatprep.subr.mxu0 0.0
          %1053 = vmatpush1.msra.mxu0 0.0
          %1054 = vmatprep.subr.mxu0 0.0
          %1055 = vmatpush1.msra.mxu0 0.0
          %1056 = vmatprep.subr.mxu0 0.0
          %1057 = vmatpush1.msra.mxu0 0.0
          %1058 = vmatprep.subr.mxu0 0.0
          %1059 = vmatpush1.msra.mxu0 0.0
          %1060 = vmatprep.subr.mxu0 0.0
          %1061 = vmatpush1.msra.mxu0 0.0
          %1062 = vmatprep.subr.mxu0 0.0
          %1063 = vmatpush1.msra.mxu0 0.0
          %1064 = vmatprep.subr.mxu0 0.0
          %1065 = vmatpush1.msra.mxu0 0.0
          %1066 = vmatprep.subr.mxu0 0.0
          %1067 = vmatpush1.msra.mxu0 0.0
          %1068 = vmatprep.subr.mxu0 0.0
          %1069 = vmatpush1.msra.mxu0 0.0
          %1070 = vmatprep.subr.mxu0 0.0
          %1071 = vmatpush1.msra.mxu0 0.0
          %1072 = vmatprep.subr.mxu0 0.0
          %1073 = vmatpush1.msra.mxu0 0.0
          %1074 = vmatprep.subr.mxu0 0.0
          %1075 = vmatpush1.msra.mxu0 0.0
          %1076 = vmatprep.subr.mxu0 0.0
          %1077 = vmatpush1.msra.mxu0 0.0
          %1078 = vmatprep.subr.mxu0 0.0
          %1079 = vmatpush1.msra.mxu0 0.0
          %1080 = vmatprep.subr.mxu0 0.0
          %1081 = vmatpush1.msra.mxu0 0.0
          %1082 = vmatprep.subr.mxu0 0.0
          %1083 = vmatpush1.msra.mxu0 0.0
          %1084 = vmatprep.subr.mxu0 0.0
          %1085 = vmatpush1.msra.mxu0 0.0
          %1086 = vmatprep.subr.mxu0 0.0
          %1087 = vmatpush1.msra.mxu0 0.0
          %1088 = vmatprep.subr.mxu0 0.0
          %1089 = vmatpush1.msra.mxu0 0.0
          %1090 = vmatprep.subr.mxu0 0.0
          %1091 = vmatpush1.msra.mxu0 0.0
          %1092 = vmatprep.subr.mxu0 0.0
          %1093 = vmatpush1.msra.mxu0 0.0
          %1094 = vmatprep.subr.mxu0 0.0
          %1095 = vmatpush1.msra.mxu0 0.0
          %1096 = vmatprep.subr.mxu0 0.0
          %1097 = vmatpush1.msra.mxu0 0.0
          %1098 = vmatprep.subr.mxu0 0.0
          %1099 = vmatpush1.msra.mxu0 0.0
          %1100 = vmatprep.subr.mxu0 0.0
          %1101 = vmatpush1.msra.mxu0 0.0
          %1102 = vmatprep.mubr.f32.mxu0 0.0
          %1103 = vmatmul.mubr.f32.gmra.mrb[0].mxu0 %v1032
          %v1104 = vpop.f32.mrb[0].mxu0
          %v1105 = vadd.f32 0.0, %v1104
          %v1106 = vpop.f32.mrb[0].mxu0
          %1107 = vdwg.mxu0
          %v1108 = vmax.f32 %v1105, 1e-24
          %v1109 = vrsqrt.pop %v1108
          %v1111 = vlaneseq
          %v1112 = vshrl.u32 %v1111, 7
          %v1113 = vsub.s32 0, %v1112
          %v1114 = vrot.slane %v1109, %v1113
          %1116 = vbcast.lane.b32.xlu0 %v1114, 256
          %v1117 = vpop.permute.xlu0 %1116
          %s1119 = sor.u32 256, 8
          %1120 = vbcast.lane.b32.xlu0 %v1114, %s1119
          %v1121 = vpop.permute.xlu0 %1120
          %s1123 = sor.u32 256, 16
          %1124 = vbcast.lane.b32.xlu0 %v1114, %s1123
          %v1125 = vpop.permute.xlu0 %1124
          %s1127 = sor.u32 256, 24
          %1128 = vbcast.lane.b32.xlu0 %v1114, %s1127
          %v1129 = vpop.permute.xlu0 %1128
          %s1131 = sor.u32 256, 32
          %1132 = vbcast.lane.b32.xlu0 %v1114, %s1131
          %v1133 = vpop.permute.xlu0 %1132
          %s1135 = sor.u32 256, 40
          %1136 = vbcast.lane.b32.xlu0 %v1114, %s1135
          %v1137 = vpop.permute.xlu0 %1136
          %s1139 = sor.u32 256, 48
          %1140 = vbcast.lane.b32.xlu0 %v1114, %s1139
          %v1141 = vpop.permute.xlu0 %1140
          %s1143 = sor.u32 256, 56
          %1144 = vbcast.lane.b32.xlu0 %v1114, %s1143
          %v1145 = vpop.permute.xlu0 %1144
          %s1147 = sor.u32 256, 64
          %1148 = vbcast.lane.b32.xlu0 %v1114, %s1147
          %v1149 = vpop.permute.xlu0 %1148
          %s1151 = sor.u32 256, 72
          %1152 = vbcast.lane.b32.xlu0 %v1114, %s1151
          %v1153 = vpop.permute.xlu0 %1152
          %v1164 = vmul.f32 %v817, %v1117
          %v1165 = vmul.f32 %v818, %v1121
          %v1166 = vmul.f32 %v819, %v1125
          %v1167 = vmul.f32 %v820, %v1129
          %v1168 = vmul.f32 %v821, %v1133
          %v1169 = vmul.f32 %v822, %v1137
          %v1170 = vmul.f32 %v823, %v1141
          %v1171 = vmul.f32 %v824, %v1145
          %v1172 = vmul.f32 %v825, %v1149
          %v1173 = vmul.f32 %v826, %v1153
          %v1174 = vld [vmem:[%s5] sm:$0xff]
          %v1175 = vld [vmem:[%s5 + $0x8] sm:$0xff]
          %v1176 = vld [vmem:[%s5 + $0x10] sm:$0xff]
          %v1177 = vld [vmem:[%s5 + $0x18] sm:$0xff]
          %v1178 = vld [vmem:[%s5 + $0x20] sm:$0xff]
          %v1179 = vld [vmem:[%s5 + $0x28] sm:$0xff]
          %v1180 = vld [vmem:[%s5 + $0x30] sm:$0xff]
          %v1181 = vld [vmem:[%s5 + $0x38] sm:$0xff]
          %v1182 = vld [vmem:[%s5 + $0x40] sm:$0xff]
          %v1183 = vld [vmem:[%s5 + $0x48] sm:$0xff]
          %v1184 = vld [vmem:[%s6] sm:$0x1]
          %1195 = vset.pattern.permute.xlu0 0
          %1196 = vperm.xlu0 %1195, %v1164
          %v1197 = vpop.permute.xlu0 %1196
          %1198 = vset.pattern.permute.xlu0 0
          %1199 = vperm.xlu0 %1198, %v1165
          %v1200 = vpop.permute.xlu0 %1199
          %1201 = vset.pattern.permute.xlu0 0
          %1202 = vperm.xlu0 %1201, %v1166
          %v1203 = vpop.permute.xlu0 %1202
          %1204 = vset.pattern.permute.xlu0 0
          %1205 = vperm.xlu0 %1204, %v1167
          %v1206 = vpop.permute.xlu0 %1205
          %1207 = vset.pattern.permute.xlu0 0
          %1208 = vperm.xlu0 %1207, %v1168
          %v1209 = vpop.permute.xlu0 %1208
          %1210 = vset.pattern.permute.xlu0 0
          %1211 = vperm.xlu0 %1210, %v1169
          %v1212 = vpop.permute.xlu0 %1211
          %1213 = vset.pattern.permute.xlu0 0
          %1214 = vperm.xlu0 %1213, %v1170
          %v1215 = vpop.permute.xlu0 %1214
          %1216 = vset.pattern.permute.xlu0 0
          %1217 = vperm.xlu0 %1216, %v1171
          %v1218 = vpop.permute.xlu0 %1217
          %1219 = vset.pattern.permute.xlu0 0
          %1220 = vperm.xlu0 %1219, %v1172
          %v1221 = vpop.permute.xlu0 %1220
          %1222 = vset.pattern.permute.xlu0 0
          %1223 = vperm.xlu0 %1222, %v1173
          %v1224 = vpop.permute.xlu0 %1223
          %v1225 = vlaneseq
          %v1226 = vshrl.u32 %v1225, 7
          %v1227 = vsub.s32 %v888, %v1226
          %v1228 = vrot.slane %v1197, %v1227
          %v1229 = vlaneseq
          %v1230 = vshrl.u32 %v1229, 7
          %v1231 = vsub.s32 %v893, %v1230
          %v1232 = vrot.slane %v1200, %v1231
          %v1233 = vsel %vm898, %v1232, %v1228
          %v1234 = vlaneseq
          %v1235 = vshrl.u32 %v1234, 7
          %v1236 = vsub.s32 %v900, %v1235
          %v1237 = vrot.slane %v1203, %v1236
          %v1238 = vsel %vm905, %v1237, %v1233
          %v1239 = vlaneseq
          %v1240 = vshrl.u32 %v1239, 7
          %v1241 = vsub.s32 %v907, %v1240
          %v1242 = vrot.slane %v1206, %v1241
          %v1243 = vsel %vm912, %v1242, %v1238
          %v1244 = vlaneseq
          %v1245 = vshrl.u32 %v1244, 7
          %v1246 = vsub.s32 %v914, %v1245
          %v1247 = vrot.slane %v1209, %v1246
          %v1248 = vsel %vm919, %v1247, %v1243
          %v1249 = vlaneseq
          %v1250 = vshrl.u32 %v1249, 7
          %v1251 = vsub.s32 %v921, %v1250
          %v1252 = vrot.slane %v1212, %v1251
          %v1253 = vsel %vm926, %v1252, %v1248
          %v1254 = vlaneseq
          %v1255 = vshrl.u32 %v1254, 7
          %v1256 = vsub.s32 %v928, %v1255
          %v1257 = vrot.slane %v1215, %v1256
          %v1258 = vsel %vm933, %v1257, %v1253
          %v1259 = vlaneseq
          %v1260 = vshrl.u32 %v1259, 7
          %v1261 = vsub.s32 %v935, %v1260
          %v1262 = vrot.slane %v1218, %v1261
          %v1263 = vsel %vm940, %v1262, %v1258
          %v1264 = vlaneseq
          %v1265 = vshrl.u32 %v1264, 7
          %v1266 = vsub.s32 %v942, %v1265
          %v1267 = vrot.slane %v1221, %v1266
          %v1268 = vsel %vm947, %v1267, %v1263
          %v1269 = vlaneseq
          %v1270 = vshrl.u32 %v1269, 7
          %v1271 = vsub.s32 %v949, %v1270
          %v1272 = vrot.slane %v1224, %v1271
          %v1273 = vsel %vm954, %v1272, %v1268
          %v1274 = vsel %vm956, %v1273, 0
          %1276 = vmatprep.subr.mxu0 0.0
          %1277 = vmatpush1.msra.mxu0 %v1174
          %1278 = vmatprep.subr.mxu0 0.0
          %1279 = vmatpush1.msra.mxu0 %v1175
          %1280 = vmatprep.subr.mxu0 0.0
          %1281 = vmatpush1.msra.mxu0 %v1176
          %1282 = vmatprep.subr.mxu0 0.0
          %1283 = vmatpush1.msra.mxu0 %v1177
          %1284 = vmatprep.subr.mxu0 0.0
          %1285 = vmatpush1.msra.mxu0 %v1178
          %1286 = vmatprep.subr.mxu0 0.0
          %1287 = vmatpush1.msra.mxu0 %v1179
          %1288 = vmatprep.subr.mxu0 0.0
          %1289 = vmatpush1.msra.mxu0 %v1180
          %1290 = vmatprep.subr.mxu0 0.0
          %1291 = vmatpush1.msra.mxu0 %v1181
          %1292 = vmatprep.subr.mxu0 0.0
          %1293 = vmatpush1.msra.mxu0 %v1182
          %1294 = vmatprep.subr.mxu0 0.0
          %1295 = vmatpush1.msra.mxu0 %v1183
          %1296 = vmatprep.subr.mxu0 0.0
          %1297 = vmatpush1.msra.mxu0 0.0
          %1298 = vmatprep.subr.mxu0 0.0
          %1299 = vmatpush1.msra.mxu0 0.0
          %1300 = vmatprep.subr.mxu0 0.0
          %1301 = vmatpush1.msra.mxu0 0.0
          %1302 = vmatprep.subr.mxu0 0.0
          %1303 = vmatpush1.msra.mxu0 0.0
          %1304 = vmatprep.subr.mxu0 0.0
          %1305 = vmatpush1.msra.mxu0 0.0
          %1306 = vmatprep.subr.mxu0 0.0
          %1307 = vmatpush1.msra.mxu0 0.0
          %1308 = vmatprep.subr.mxu0 0.0
          %1309 = vmatpush1.msra.mxu0 0.0
          %1310 = vmatprep.subr.mxu0 0.0
          %1311 = vmatpush1.msra.mxu0 0.0
          %1312 = vmatprep.subr.mxu0 0.0
          %1313 = vmatpush1.msra.mxu0 0.0
          %1314 = vmatprep.subr.mxu0 0.0
          %1315 = vmatpush1.msra.mxu0 0.0
          %1316 = vmatprep.subr.mxu0 0.0
          %1317 = vmatpush1.msra.mxu0 0.0
          %1318 = vmatprep.subr.mxu0 0.0
          %1319 = vmatpush1.msra.mxu0 0.0
          %1320 = vmatprep.subr.mxu0 0.0
          %1321 = vmatpush1.msra.mxu0 0.0
          %1322 = vmatprep.subr.mxu0 0.0
          %1323 = vmatpush1.msra.mxu0 0.0
          %1324 = vmatprep.subr.mxu0 0.0
          %1325 = vmatpush1.msra.mxu0 0.0
          %1326 = vmatprep.subr.mxu0 0.0
          %1327 = vmatpush1.msra.mxu0 0.0
          %1328 = vmatprep.subr.mxu0 0.0
          %1329 = vmatpush1.msra.mxu0 0.0
          %1330 = vmatprep.subr.mxu0 0.0
          %1331 = vmatpush1.msra.mxu0 0.0
          %1332 = vmatprep.subr.mxu0 0.0
          %1333 = vmatpush1.msra.mxu0 0.0
          %1334 = vmatprep.subr.mxu0 0.0
          %1335 = vmatpush1.msra.mxu0 0.0
          %1336 = vmatprep.subr.mxu0 0.0
          %1337 = vmatpush1.msra.mxu0 0.0
          %1338 = vmatprep.subr.mxu0 0.0
          %1339 = vmatpush1.msra.mxu0 0.0
          %1340 = vmatprep.mubr.f32.mxu0 0.0
          %1341 = vmatmul.mubr.f32.gmra.mrb[0].mxu0 %v1274
          %v1342 = vpop.f32.mrb[0].mxu0
          %v1343 = vadd.f32 %v1184, %v1342
          %v1344 = vpop.f32.mrb[0].mxu0
          %1345 = vdwg.mxu0
          %vm1346 = vcmask 516096
          %1347 = vst.msk [vmem:[%s320] sm:$0x1] %vm1346, %v1343
        $region60: #{tpu_custom_call.1} parent=51 // pred_fallthru
          _
        %s1348 = sand.u32 %s217, 1
        %s1349 = scalar_lea.sflag [#allocation4], %s1348
        %s1350 = sand.u32 %s217, 1
        %s1351 = scalar_lea.vmem [#allocation3], %s1350
        // Predicated region
        $region61: #{tpu_custom_call.1} parent=51 // pred_check
          %p1352 = pneg %p227
        $region62: #{tpu_custom_call.1} parent=51 // pred_check_branch
          %1354 = sbr.rel (%p1352) target = $region64
        $region63: #{tpu_custom_call.1} parent=51 // pred_region
          %s1356 = ssub.s32 16, 16
          %1357 = vsyncadd %s1349, %s1356
          %s1358 = smul.addr %s26, 16
          %s1359 = scalar_lea.hbm %s8, %s1358
          %s1361 = sshll.u32 %s1351, 4
          %s1362 = int_to_ptr.vmem [resolvable:$true] %s1361
          %1364 = dma.vmem_to_hbm [thread:$0]  %s1362, 16, %s1359, %s1349
        $region64: #{tpu_custom_call.1} parent=51 // pred_fallthru
          _
      $region52: #{tpu_custom_call.1} parent=5 // pred_fallthru
        _
      %p1365 = scmp.le.s32.totalorder 2, %s17
      // Predicated region
      $region65: #{tpu_custom_call.1} parent=5 // pred_check
        %p1366 = pneg %p1365
      $region66: #{tpu_custom_call.1} parent=5 // pred_check_branch
        %1368 = sbr.rel (%p1366) target = $region68
      $region67: #{tpu_custom_call.1} parent=5 // pred_region
        %s1369 = ssub.s32 %s17, 2
        // Predicated region
        $region69: #{tpu_custom_call.1} parent=67 // pred_check
          %p1370 = pneg %p233
        $region70: #{tpu_custom_call.1} parent=67 // pred_check_branch
          %1372 = sbr.rel (%p1370) target = $region72
        $region71: #{tpu_custom_call.1} parent=67 // pred_region
          %s1373 = sand.u32 %s218, 1
          %s1374 = scalar_lea.sflag [#allocation4], %s1373
          %s1375 = sand.u32 %s218, 1
          %s1376 = scalar_lea.vmem [#allocation3], %s1375
          %1377 = dma.done %s1374, 16
        $region72: #{tpu_custom_call.1} parent=67 // pred_fallthru
          _
      $region68: #{tpu_custom_call.1} parent=5 // pred_fallthru
        _
    $region6: #{tpu_custom_call.1} parent=1 // loop_footer
      %s21 = sadd.s32 1, %s17
    $region7: #{tpu_custom_call.1} parent=1 // loop_footer_branch
      %16 = sbr.rel target = $region3
    $region8: #{tpu_custom_call.1} parent=1 // loop_exit
      _
    %1378 = vsyncpa [#allocation4], 1
    %s1379 = scalar_lea.sflag [#allocation4], 1
    %1380 = vsyncpa %s1379, 1

</llo_original>
